<compile_context>
chip_gen: v5e
topology: v5e:2x2
jax: 0.10.0
libtpu: 0.0.40
codegen_flags: <defaults>
</compile_context>

<pallas_src>
import jax
import jax.numpy as jnp
from jax.experimental import pallas as pl
from jax.experimental.pallas import tpu as pltpu


D_MODEL = 128          # d_model from the module
C_IN = 3               # forward views input to (-1, 3, 224, 224)
H = W = 224
FEAT = 2048            # resnet152 feature dim expected by L1

LANES = 128
SPATIAL = H * W                      # 50176
SUB_TOTAL = SPATIAL // LANES         # 392   (50176 = 392 * 128) -- full spatial block
MAX_B_TILE = 8                       # samples per batch tile


def _cdiv(a, b):
    return -(-a // b)


def classifier_kernel(x_ref, ws_ref, bs_ref,
                      w1_ref, b1_ref, w2_ref, b2_ref, w3_ref, b3_ref,
                      out_ref):
    # Global average pool over the folded spatial dims.
    # x_ref: (b_tile, 3, 392, 128)
    xf = x_ref[...].astype(jnp.float32)
    part = jnp.sum(xf, axis=2)                            # sublane reduce -> (b_tile, 3, 128)
    pooled = jnp.sum(part, axis=-1) * (1.0 / SPATIAL)     # lane reduce    -> (b_tile, 3)

    # Backbone stand-in: Linear(3 -> 2048) as 3 broadcast FMAs (a K=3 MXU matmul
    # would be almost entirely wasted latency), then ReLU.
    feat = (bs_ref[...]
            + pooled[:, 0:1] * ws_ref[0:1, :]
            + pooled[:, 1:2] * ws_ref[1:2, :]
            + pooled[:, 2:3] * ws_ref[2:3, :])            # (b_tile, 2048)
    feat = jnp.maximum(feat, 0.0)

    # L1 (2048 -> 128) + ReLU
    h1 = jnp.dot(feat, w1_ref[...],
                 preferred_element_type=jnp.float32) + b1_ref[...]
    h1 = jnp.maximum(h1, 0.0)

    # L2 (128 -> 32) + ReLU
    h2 = jnp.dot(h1, w2_ref[...],
                 preferred_element_type=jnp.float32) + b2_ref[...]
    h2 = jnp.maximum(h2, 0.0)

    # L3 (32 -> 2)
    out_ref[0] = (jnp.dot(h2, w3_ref[...],
                          preferred_element_type=jnp.float32)
                  + b3_ref[...]).astype(out_ref.dtype)


def image_classifier_forward(mels, params):
    """mels: any array whose total size is B*3*224*224 (mirrors .view(-1,3,224,224))."""
    x = mels.reshape(-1, C_IN, H, W)               # out = mels.view(-1, 3, 224, 224)
    B = x.shape[0]

    # Batch tiling: for small B keep >= 2 tiles so v7x's second TensorCore gets work
    # (the batch grid axis is "parallel"); otherwise use the max tile size.
    if 2 <= B <= MAX_B_TILE:
        b_tile = _cdiv(B, 2)
    else:
        b_tile = min(B, MAX_B_TILE)
    nb = _cdiv(B, b_tile)

    # Fold spatial into (sublane, lane) = (392, 128); keep the original dtype so bf16
    # inputs stream at half the bytes (upcast happens in-kernel).  No batch padding:
    # a partial last block reads unspecified rows which are sliced off below.
    x_folded = x.reshape(B, C_IN, SUB_TOTAL, LANES)

    ws, bs, w1, b1, w2, b2, w3, b3 = params

    def resident(a):
        # Whole-array block with a constant index_map -> DMA'd once, stays in VMEM.
        n = a.ndim
        return pl.BlockSpec(a.shape, lambda b, n=n: (0,) * n)

    bytes_x = int(x_folded.size) * x_folded.dtype.itemsize
    bytes_w = sum(int(a.size) * a.dtype.itemsize for a in params)
    cost = pl.CostEstimate(
        flops=int(B * (C_IN * SPATIAL                    # pooling adds
                       + 2 * C_IN * FEAT                 # stem FMAs
                       + 2 * FEAT * D_MODEL              # L1
                       + 2 * D_MODEL * (D_MODEL // 4)    # L2
                       + 2 * (D_MODEL // 4) * 2)),       # L3
        transcendentals=0,
        bytes_accessed=int(bytes_x + bytes_w + nb * b_tile * 2 * 4),
    )

    out = pl.pallas_call(
        classifier_kernel,
        out_shape=jax.ShapeDtypeStruct((nb, b_tile, 2), jnp.float32),
        grid_spec=pltpu.PrefetchScalarGridSpec(
            num_scalar_prefetch=0,
            grid=(nb,),
            in_specs=[
                pl.BlockSpec((b_tile, C_IN, SUB_TOTAL, LANES),
                             lambda b: (b, 0, 0, 0)),
                resident(ws), resident(bs),
                resident(w1), resident(b1),
                resident(w2), resident(b2),
                resident(w3), resident(b3),
            ],
            out_specs=pl.BlockSpec((1, b_tile, 2), lambda b: (b, 0, 0)),
            scratch_shapes=[],
        ),
        compiler_params=pltpu.CompilerParams(
            dimension_semantics=("parallel",),
            vmem_limit_bytes=32 << 20,   # ~10-17 MiB working set at b_tile=8 f32
        ),
        cost_estimate=cost,
    )(x_folded, ws, bs, w1, b1, w2, b2, w3, b3)

    # Flattened row i == batch row i; rows >= B (partial last tile) are garbage -> drop.
    return out.reshape(nb * b_tile, 2)[:B]


def init_params(key):
    """Deterministic PyTorch-Linear-style init (uniform +-1/sqrt(fan_in))."""
    ks = jax.random.split(key, 8)

    def linear(kw, kb, fan_in, fan_out):
        bound = 1.0 / jnp.sqrt(jnp.float32(fan_in))
        w = jax.random.uniform(kw, (fan_in, fan_out), jnp.float32, -bound, bound)
        b = jax.random.uniform(kb, (1, fan_out), jnp.float32, -bound, bound)
        return w, b

    ws, bs = linear(ks[0], ks[1], C_IN, FEAT)                 # backbone stand-in
    w1, b1 = linear(ks[2], ks[3], FEAT, D_MODEL)              # L1: 2048 -> 128
    w2, b2 = linear(ks[4], ks[5], D_MODEL, D_MODEL // 4)      # L2: 128 -> 32
    w3, b3 = linear(ks[6], ks[7], D_MODEL // 4, 2)            # L3: 32 -> 2
    return ws, bs, w1, b1, w2, b2, w3, b3


if __name__ == "__main__":
    key = jax.random.PRNGKey(0)
    k_x, k_p = jax.random.split(key)

    B = 2
    # "mels" handed to forward; .view(-1, 3, 224, 224) just reinterprets it.
    x = jax.random.normal(k_x, (B, C_IN, H, W), dtype=jnp.float32)
    params = init_params(k_p)

    out = image_classifier_forward(x, params)
    out = jax.block_until_ready(out)
    assert out.shape == (B, 2) and out.dtype == jnp.float32

    # sanity check against a pure-JAX reference of the same computation
    ws, bs, w1, b1, w2, b2, w3, b3 = params
    pooled = jnp.mean(x.reshape(B, C_IN, H * W).astype(jnp.float32), axis=-1)
    feat = jnp.maximum(pooled @ ws + bs, 0.0)
    h1 = jnp.maximum(feat @ w1 + b1, 0.0)
    h2 = jnp.maximum(h1 @ w2 + b2, 0.0)
    ref = h2 @ w3 + b3
    assert jnp.allclose(out, ref, atol=1e-3, rtol=1e-3)

    print("KERNEL_OK")
</pallas_src>

<mosaic_0001>
module attributes {stable_mosaic.version = 11 : i64} {
  func.func @classifier_kernel(%arg0: i32, %arg1: memref<1x3x392x128xf32, #tpu.memory_space<vmem>>, %arg2: memref<3x2048xf32, #tpu.memory_space<vmem>>, %arg3: memref<1x2048xf32, #tpu.memory_space<vmem>>, %arg4: memref<2048x128xf32, #tpu.memory_space<vmem>>, %arg5: memref<1x128xf32, #tpu.memory_space<vmem>>, %arg6: memref<128x32xf32, #tpu.memory_space<vmem>>, %arg7: memref<1x32xf32, #tpu.memory_space<vmem>>, %arg8: memref<32x2xf32, #tpu.memory_space<vmem>>, %arg9: memref<1x2xf32, #tpu.memory_space<vmem>>, %arg10: memref<1x1x2xf32, #tpu.memory_space<vmem>>) attributes {dimension_semantics = [#tpu.dimension_semantics<parallel>], iteration_bounds = array<i64: 2>, scalar_prefetch = 0 : i64, scratch_operands = 0 : i64, tpu.core_type = #tpu.core_type<tc>, window_params = [{transform_indices = @transform_0, window_bounds = array<i64: 1, 3, 392, 128>}, {pipeline_mode = #tpu.pipeline_mode<synchronous>, transform_indices = @transform_1, window_bounds = array<i64: 3, 2048>}, {pipeline_mode = #tpu.pipeline_mode<synchronous>, transform_indices = @transform_2, window_bounds = array<i64: 1, 2048>}, {pipeline_mode = #tpu.pipeline_mode<synchronous>, transform_indices = @transform_3, window_bounds = array<i64: 2048, 128>}, {pipeline_mode = #tpu.pipeline_mode<synchronous>, transform_indices = @transform_4, window_bounds = array<i64: 1, 128>}, {pipeline_mode = #tpu.pipeline_mode<synchronous>, transform_indices = @transform_5, window_bounds = array<i64: 128, 32>}, {pipeline_mode = #tpu.pipeline_mode<synchronous>, transform_indices = @transform_6, window_bounds = array<i64: 1, 32>}, {pipeline_mode = #tpu.pipeline_mode<synchronous>, transform_indices = @transform_7, window_bounds = array<i64: 32, 2>}, {pipeline_mode = #tpu.pipeline_mode<synchronous>, transform_indices = @transform_8, window_bounds = array<i64: 1, 2>}, {transform_indices = @transform_9, window_bounds = array<i64: 1, 1, 2>}]} {
    %c0 = arith.constant 0 : index
    %c0_0 = arith.constant 0 : index
    %c0_1 = arith.constant 0 : index
    %c0_2 = arith.constant 0 : index
    %0 = vector.load %arg1[%c0, %c0_0, %c0_1, %c0_2] : memref<1x3x392x128xf32, #tpu.memory_space<vmem>>, vector<1x3x392x128xf32>
    %cst = arith.constant dense<0.000000e+00> : vector<1x3x128xf32>
    %1 = vector.multi_reduction <add>, %0, %cst [2] : vector<1x3x392x128xf32> to vector<1x3x128xf32>
    %cst_3 = arith.constant dense<0.000000e+00> : vector<1x3xf32>
    %2 = vector.multi_reduction <add>, %1, %cst_3 [2] : vector<1x3x128xf32> to vector<1x3xf32>
    %cst_4 = arith.constant 1.99298465E-5 : f32
    %3 = vector.broadcast %cst_4 : f32 to vector<1x3xf32>
    %4 = arith.mulf %2, %3 : vector<1x3xf32>
    %c0_5 = arith.constant 0 : index
    %c0_6 = arith.constant 0 : index
    %5 = vector.load %arg3[%c0_5, %c0_6] : memref<1x2048xf32, #tpu.memory_space<vmem>>, vector<1x2048xf32>
    %6 = vector.extract_strided_slice %4 {offsets = [0, 0], sizes = [1, 1], strides = [1, 1]} : vector<1x3xf32> to vector<1x1xf32>
    %c0_7 = arith.constant 0 : index
    %c0_8 = arith.constant 0 : index
    %7 = vector.load %arg2[%c0_7, %c0_8] : memref<3x2048xf32, #tpu.memory_space<vmem>>, vector<1x2048xf32>
    %8 = vector.broadcast %6 : vector<1x1xf32> to vector<1x2048xf32>
    %9 = arith.mulf %8, %7 : vector<1x2048xf32>
    %10 = arith.addf %5, %9 : vector<1x2048xf32>
    %11 = vector.extract_strided_slice %4 {offsets = [0, 1], sizes = [1, 1], strides = [1, 1]} : vector<1x3xf32> to vector<1x1xf32>
    %c1 = arith.constant 1 : index
    %c0_9 = arith.constant 0 : index
    %12 = vector.load %arg2[%c1, %c0_9] : memref<3x2048xf32, #tpu.memory_space<vmem>>, vector<1x2048xf32>
    %13 = vector.broadcast %11 : vector<1x1xf32> to vector<1x2048xf32>
    %14 = arith.mulf %13, %12 : vector<1x2048xf32>
    %15 = arith.addf %10, %14 : vector<1x2048xf32>
    %16 = vector.extract_strided_slice %4 {offsets = [0, 2], sizes = [1, 1], strides = [1, 1]} : vector<1x3xf32> to vector<1x1xf32>
    %c2 = arith.constant 2 : index
    %c0_10 = arith.constant 0 : index
    %17 = vector.load %arg2[%c2, %c0_10] : memref<3x2048xf32, #tpu.memory_space<vmem>>, vector<1x2048xf32>
    %18 = vector.broadcast %16 : vector<1x1xf32> to vector<1x2048xf32>
    %19 = arith.mulf %18, %17 : vector<1x2048xf32>
    %20 = arith.addf %15, %19 : vector<1x2048xf32>
    %cst_11 = arith.constant 0.000000e+00 : f32
    %21 = vector.broadcast %cst_11 : f32 to vector<1x2048xf32>
    %22 = arith.maximumf %20, %21 : vector<1x2048xf32>
    %c0_12 = arith.constant 0 : index
    %c0_13 = arith.constant 0 : index
    %23 = vector.load %arg4[%c0_12, %c0_13] : memref<2048x128xf32, #tpu.memory_space<vmem>>, vector<2048x128xf32>
    %cst_14 = arith.constant dense<0.000000e+00> : vector<1x128xf32>
    %24 = tpu.matmul %22, %23, %cst_14 {dimension_numbers = #tpu.dot_dimension_numbers<[1], [0], [0], [1], [0, 0, 1, 1], [], []>} : vector<1x2048xf32>, vector<2048x128xf32>, vector<1x128xf32> -> vector<1x128xf32>
    %c0_15 = arith.constant 0 : index
    %c0_16 = arith.constant 0 : index
    %25 = vector.load %arg5[%c0_15, %c0_16] : memref<1x128xf32, #tpu.memory_space<vmem>>, vector<1x128xf32>
    %26 = arith.addf %24, %25 : vector<1x128xf32>
    %cst_17 = arith.constant 0.000000e+00 : f32
    %27 = vector.broadcast %cst_17 : f32 to vector<1x128xf32>
    %28 = arith.maximumf %26, %27 : vector<1x128xf32>
    %c0_18 = arith.constant 0 : index
    %c0_19 = arith.constant 0 : index
    %29 = vector.load %arg6[%c0_18, %c0_19] : memref<128x32xf32, #tpu.memory_space<vmem>>, vector<128x32xf32>
    %cst_20 = arith.constant dense<0.000000e+00> : vector<1x32xf32>
    %30 = tpu.matmul %28, %29, %cst_20 {dimension_numbers = #tpu.dot_dimension_numbers<[1], [0], [0], [1], [0, 0, 1, 1], [], []>} : vector<1x128xf32>, vector<128x32xf32>, vector<1x32xf32> -> vector<1x32xf32>
    %c0_21 = arith.constant 0 : index
    %c0_22 = arith.constant 0 : index
    %31 = vector.load %arg7[%c0_21, %c0_22] : memref<1x32xf32, #tpu.memory_space<vmem>>, vector<1x32xf32>
    %32 = arith.addf %30, %31 : vector<1x32xf32>
    %cst_23 = arith.constant 0.000000e+00 : f32
    %33 = vector.broadcast %cst_23 : f32 to vector<1x32xf32>
    %34 = arith.maximumf %32, %33 : vector<1x32xf32>
    %c0_24 = arith.constant 0 : index
    %c0_25 = arith.constant 0 : index
    %35 = vector.load %arg8[%c0_24, %c0_25] : memref<32x2xf32, #tpu.memory_space<vmem>>, vector<32x2xf32>
    %cst_26 = arith.constant dense<0.000000e+00> : vector<1x2xf32>
    %36 = tpu.matmul %34, %35, %cst_26 {dimension_numbers = #tpu.dot_dimension_numbers<[1], [0], [0], [1], [0, 0, 1, 1], [], []>} : vector<1x32xf32>, vector<32x2xf32>, vector<1x2xf32> -> vector<1x2xf32>
    %c0_27 = arith.constant 0 : index
    %c0_28 = arith.constant 0 : index
    %37 = vector.load %arg9[%c0_27, %c0_28] : memref<1x2xf32, #tpu.memory_space<vmem>>, vector<1x2xf32>
    %38 = arith.addf %36, %37 : vector<1x2xf32>
    %c0_29 = arith.constant 0 : index
    %c0_30 = arith.constant 0 : index
    %c0_31 = arith.constant 0 : index
    %39 = vector.load %arg10[%c0_29, %c0_30, %c0_31] : memref<1x1x2xf32, #tpu.memory_space<vmem>>, vector<1x1x2xf32>
    %40 = vector.shape_cast %39 : vector<1x1x2xf32> to vector<1x2xf32>
    %41 = vector.shape_cast %38 : vector<1x2xf32> to vector<1x1x2xf32>
    tpu.vector_store %arg10[%c0_29, %c0_30, %c0_31], %41 {strides = array<i32>} : memref<1x1x2xf32, #tpu.memory_space<vmem>>, vector<1x1x2xf32>,
    return
  }
  func.func @transform_0(%arg0: i32) -> (i32, i32, i32, i32) {
    %c0_i32 = arith.constant 0 : i32
    %c0_i32_0 = arith.constant 0 : i32
    %c0_i32_1 = arith.constant 0 : i32
    %c0_i32_2 = arith.constant 0 : i32
    return %arg0, %c0_i32, %c0_i32_0, %c0_i32_1 : i32, i32, i32, i32
  }
  func.func @transform_1(%arg0: i32) -> (i32, i32) {
    %c0_i32 = arith.constant 0 : i32
    %c0_i32_0 = arith.constant 0 : i32
    %c0_i32_1 = arith.constant 0 : i32
    return %c0_i32, %c0_i32_0 : i32, i32
  }
  func.func @transform_2(%arg0: i32) -> (i32, i32) {
    %c0_i32 = arith.constant 0 : i32
    %c0_i32_0 = arith.constant 0 : i32
    %c0_i32_1 = arith.constant 0 : i32
    return %c0_i32, %c0_i32_0 : i32, i32
  }
  func.func @transform_3(%arg0: i32) -> (i32, i32) {
    %c0_i32 = arith.constant 0 : i32
    %c0_i32_0 = arith.constant 0 : i32
    %c0_i32_1 = arith.constant 0 : i32
    return %c0_i32, %c0_i32_0 : i32, i32
  }
  func.func @transform_4(%arg0: i32) -> (i32, i32) {
    %c0_i32 = arith.constant 0 : i32
    %c0_i32_0 = arith.constant 0 : i32
    %c0_i32_1 = arith.constant 0 : i32
    return %c0_i32, %c0_i32_0 : i32, i32
  }
  func.func @transform_5(%arg0: i32) -> (i32, i32) {
    %c0_i32 = arith.constant 0 : i32
    %c0_i32_0 = arith.constant 0 : i32
    %c0_i32_1 = arith.constant 0 : i32
    return %c0_i32, %c0_i32_0 : i32, i32
  }
  func.func @transform_6(%arg0: i32) -> (i32, i32) {
    %c0_i32 = arith.constant 0 : i32
    %c0_i32_0 = arith.constant 0 : i32
    %c0_i32_1 = arith.constant 0 : i32
    return %c0_i32, %c0_i32_0 : i32, i32
  }
  func.func @transform_7(%arg0: i32) -> (i32, i32) {
    %c0_i32 = arith.constant 0 : i32
    %c0_i32_0 = arith.constant 0 : i32
    %c0_i32_1 = arith.constant 0 : i32
    return %c0_i32, %c0_i32_0 : i32, i32
  }
  func.func @transform_8(%arg0: i32) -> (i32, i32) {
    %c0_i32 = arith.constant 0 : i32
    %c0_i32_0 = arith.constant 0 : i32
    %c0_i32_1 = arith.constant 0 : i32
    return %c0_i32, %c0_i32_0 : i32, i32
  }
  func.func @transform_9(%arg0: i32) -> (i32, i32, i32) {
    %c0_i32 = arith.constant 0 : i32
    %c0_i32_0 = arith.constant 0 : i32
    %c0_i32_1 = arith.constant 0 : i32
    return %arg0, %c0_i32, %c0_i32_0 : i32, i32, i32
  }
}

</mosaic_0001>

<llo_original>
// kernel: tpu_custom_call.1
$region0: #{tpu_custom_call.1}
  #allocation0 [shape = 'u32[]', space=smem, size = 0x4, offset = 0x4, fixed_abs, tag = 'smem constant byte address 0x4 - core index']
  #allocation1 [shape = 'u32[72,128]{1,0:T(1,128)}', space=vmem, size = 0x9000, scoped, tag = 'internal scratch']
  %s0 = inlined_call_operand.hbm [shape: f32[2,3,392,128], index: 0, kind: input, shape index: {}]
  %s1 = inlined_call_operand.hbm [shape: f32[3,2048], index: 1, kind: input, shape index: {}]
  %s2 = inlined_call_operand.hbm [shape: f32[1,2048], index: 2, kind: input, shape index: {}]
  %s3 = inlined_call_operand.hbm [shape: f32[2048,128], index: 3, kind: input, shape index: {}]
  %s4 = inlined_call_operand.hbm [shape: f32[1,128], index: 4, kind: input, shape index: {}]
  %s5 = inlined_call_operand.vmem [shape: f32[128,32], index: 5, kind: input, shape index: {}]
  %s6 = inlined_call_operand.hbm [shape: f32[1,32], index: 6, kind: input, shape index: {}]
  %s7 = inlined_call_operand.vmem [shape: f32[32,2], index: 7, kind: input, shape index: {}]
  %s8 = inlined_call_operand.hbm [shape: f32[1,2], index: 8, kind: input, shape index: {}]
  %s9 = inlined_call_operand.hbm [shape: f32[2,1,2], index: 9, kind: output, shape index: {}]
  %s10 = sld [smem:[#allocation0]]
  $region97: #{tpu_custom_call.1} parent=0
    _
  %s12 = ssub.s32 1, %s10
  %s13 = scalar_select 0, %s12, %s10
  $region1: #{tpu_custom_call.1} parent=0
    #allocation2 [shape = 'u8[1204224]{0}', space=vmem, size = 0x126000, scoped, tag = 'input window, operand 0']
    #allocation3 [shape = 's32[2]{0}', space=sflag, size = 0x8, scoped, tag = 'scoped memory for tpu_custom_call.1']
    #allocation4 [shape = 's32[2]{0}', space=sflag, size = 0x8, scoped, tag = 'scoped memory for tpu_custom_call.1']
    #allocation5 [shape = 'u8[32768]{0}', space=vmem, size = 0x8000, scoped, tag = 'input window, operand 1, single buffered']
    #allocation6 [shape = 's32[1]{0}', space=sflag, size = 0x4, scoped, tag = 'scoped memory for tpu_custom_call.1']
    #allocation7 [shape = 'u8[8192]{0}', space=vmem, size = 0x2000, scoped, tag = 'input window, operand 2, single buffered']
    #allocation8 [shape = 'u8[1048576]{0}', space=vmem, size = 0x100000, scoped, tag = 'input window, operand 3, single buffered']
    #allocation9 [shape = 's32[1]{0}', space=sflag, size = 0x4, scoped, tag = 'scoped memory for tpu_custom_call.1']
    #allocation10 [shape = 'u8[512]{0}', space=vmem, size = 0x400, scoped, tag = 'input window, operand 4, single buffered']
    #allocation11 [shape = 'u8[512]{0}', space=vmem, size = 0x400, scoped, tag = 'input window, operand 6, single buffered']
    #allocation12 [shape = 's32[1]{0}', space=sflag, size = 0x4, scoped, tag = 'scoped memory for tpu_custom_call.1']
    #allocation13 [shape = 'u8[512]{0}', space=vmem, size = 0x400, scoped, tag = 'input window, operand 8, single buffered']
    #allocation14 [shape = 'u8[1024]{0}', space=vmem, size = 0x400, scoped, tag = 'output window, operand 0']
    %14 = vsyncpa [#allocation3], 0
    %s15 = scalar_lea.sflag [#allocation3], 1
    %16 = vsyncpa %s15, 0
    %17 = vsyncpa [#allocation6], 0
    %18 = vsyncpa [#allocation9], 0
    %19 = vsyncpa [#allocation12], 0
    %20 = vsyncpa [#allocation4], 0
    %s21 = scalar_lea.sflag [#allocation4], 1
    %22 = vsyncpa %s21, 0
    loop: start=0, step=1, limit=4
    $region2: #{tpu_custom_call.1} parent=1 // loop_pre_header
      _
    $region3: #{tpu_custom_call.1} parent=1 // loop_header
      %s24 = sphi 0, %s28
      %p25 = scmp.ge.s32.totalorder %s24, 4
      %s34 = sphi 0, %s36
      %s37 = sphi 0, %s34
      %s38 = sphi 0, %s37
      %s54 = sphi 0, %s38
      %s58 = sphi 0, %s58
      %s60 = sphi 0, %s58
      %s61 = sphi 0, %s60
      %s75 = sphi 0, %s61
      %s79 = sphi 0, %s79
      %s81 = sphi 0, %s79
      %s82 = sphi 0, %s81
      %s96 = sphi 0, %s82
      %s100 = sphi 0, %s100
      %s102 = sphi 0, %s100
      %s103 = sphi 0, %s102
      %s117 = sphi 0, %s103
      %s121 = sphi 0, %s121
      %s123 = sphi 0, %s121
      %s124 = sphi 0, %s123
      %s138 = sphi 0, %s124
      %s142 = sphi 0, %s142
      %s144 = sphi 0, %s142
      %s145 = sphi 0, %s144
      %s159 = sphi 0, %s145
      %s163 = sphi 0, %s163
      %s165 = sphi 0, %s163
      %s166 = sphi 0, %s165
      %s180 = sphi 0, %s166
      %s184 = sphi 0, %s184
      %s186 = sphi 0, %s184
      %s187 = sphi 0, %s186
      %s201 = sphi 0, %s187
      %s205 = sphi 0, %s205
      %s207 = sphi 0, %s205
      %s208 = sphi 0, %s207
      %s222 = sphi 0, %s208
      %s228 = sphi 0, %s230
      %s231 = sphi 0, %s228
      %s232 = sphi 0, %s231
      %s248 = sphi 0, %s232
    $region4: #{tpu_custom_call.1} parent=1 // loop_header_branch
      %27 = sbr.rel (%p25) target = $region8
    $region5: #{tpu_custom_call.1} parent=1 // loop_body
      %s29 = ssub.s32 %s24, 1
      %s30 = ssub.s32 %s24, 2
      %s31 = sadd.s32 %s24, 1
      %s32 = ssub.s32 %s24, %s31
      %p33 = scmp.eq.s32.totalorder %s32, 0
      %s35 = sadd.s32 %s34, 1
      %s36 = scalar_select %p33, %s34, %s35
      %p39 = pneg %p33
      %p40 = scmp.eq.s32.totalorder %s24, 1
      %p41 = por %p39, %p40
      %p42 = scmp.ne.s32.totalorder %s34, %s37
      %p43 = scmp.eq.s32.totalorder %s24, 0
      %p44 = por %p42, %p43
      %p45 = scmp.ne.s32.totalorder %s34, %s37
      %p46 = scmp.eq.s32.totalorder %s29, 1
      %p47 = por %p45, %p46
      %p48 = scmp.ne.s32.totalorder %s37, %s38
      %p49 = scmp.eq.s32.totalorder %s29, 0
      %p50 = por %p48, %p49
      %p51 = scmp.ne.s32.totalorder %s37, %s38
      %p52 = scmp.eq.s32.totalorder %s30, 1
      %p53 = por %p51, %p52
      %p55 = scmp.ne.s32.totalorder %s38, %s54
      %p56 = scmp.eq.s32.totalorder %s30, 0
      %p57 = por %p55, %p56
      %s59 = sadd.s32 %s58, 1
      %p62 = scmp.eq.s32.totalorder %s24, 1
      %p63 = scmp.ne.s32.totalorder %s58, %s60
      %p64 = scmp.eq.s32.totalorder %s24, 0
      %p65 = por %p63, %p64
      %p66 = scmp.ne.s32.totalorder %s58, %s60
      %p67 = scmp.eq.s32.totalorder %s29, 1
      %p68 = por %p66, %p67
      %p69 = scmp.ne.s32.totalorder %s60, %s61
      %p70 = scmp.eq.s32.totalorder %s29, 0
      %p71 = por %p69, %p70
      %p72 = scmp.ne.s32.totalorder %s60, %s61
      %p73 = scmp.eq.s32.totalorder %s30, 1
      %p74 = por %p72, %p73
      %p76 = scmp.ne.s32.totalorder %s61, %s75
      %p77 = scmp.eq.s32.totalorder %s30, 0
      %p78 = por %p76, %p77
      %s80 = sadd.s32 %s79, 1
      %p83 = scmp.eq.s32.totalorder %s24, 1
      %p84 = scmp.ne.s32.totalorder %s79, %s81
      %p85 = scmp.eq.s32.totalorder %s24, 0
      %p86 = por %p84, %p85
      %p87 = scmp.ne.s32.totalorder %s79, %s81
      %p88 = scmp.eq.s32.totalorder %s29, 1
      %p89 = por %p87, %p88
      %p90 = scmp.ne.s32.totalorder %s81, %s82
      %p91 = scmp.eq.s32.totalorder %s29, 0
      %p92 = por %p90, %p91
      %p93 = scmp.ne.s32.totalorder %s81, %s82
      %p94 = scmp.eq.s32.totalorder %s30, 1
      %p95 = por %p93, %p94
      %p97 = scmp.ne.s32.totalorder %s82, %s96
      %p98 = scmp.eq.s32.totalorder %s30, 0
      %p99 = por %p97, %p98
      %s101 = sadd.s32 %s100, 1
      %p104 = scmp.eq.s32.totalorder %s24, 1
      %p105 = scmp.ne.s32.totalorder %s100, %s102
      %p106 = scmp.eq.s32.totalorder %s24, 0
      %p107 = por %p105, %p106
      %p108 = scmp.ne.s32.totalorder %s100, %s102
      %p109 = scmp.eq.s32.totalorder %s29, 1
      %p110 = por %p108, %p109
      %p111 = scmp.ne.s32.totalorder %s102, %s103
      %p112 = scmp.eq.s32.totalorder %s29, 0
      %p113 = por %p111, %p112
      %p114 = scmp.ne.s32.totalorder %s102, %s103
      %p115 = scmp.eq.s32.totalorder %s30, 1
      %p116 = por %p114, %p115
      %p118 = scmp.ne.s32.totalorder %s103, %s117
      %p119 = scmp.eq.s32.totalorder %s30, 0
      %p120 = por %p118, %p119
      %s122 = sadd.s32 %s121, 1
      %p125 = scmp.eq.s32.totalorder %s24, 1
      %p126 = scmp.ne.s32.totalorder %s121, %s123
      %p127 = scmp.eq.s32.totalorder %s24, 0
      %p128 = por %p126, %p127
      %p129 = scmp.ne.s32.totalorder %s121, %s123
      %p130 = scmp.eq.s32.totalorder %s29, 1
      %p131 = por %p129, %p130
      %p132 = scmp.ne.s32.totalorder %s123, %s124
      %p133 = scmp.eq.s32.totalorder %s29, 0
      %p134 = por %p132, %p133
      %p135 = scmp.ne.s32.totalorder %s123, %s124
      %p136 = scmp.eq.s32.totalorder %s30, 1
      %p137 = por %p135, %p136
      %p139 = scmp.ne.s32.totalorder %s124, %s138
      %p140 = scmp.eq.s32.totalorder %s30, 0
      %p141 = por %p139, %p140
      %s143 = sadd.s32 %s142, 1
      %p146 = scmp.eq.s32.totalorder %s24, 1
      %p147 = scmp.ne.s32.totalorder %s142, %s144
      %p148 = scmp.eq.s32.totalorder %s24, 0
      %p149 = por %p147, %p148
      %p150 = scmp.ne.s32.totalorder %s142, %s144
      %p151 = scmp.eq.s32.totalorder %s29, 1
      %p152 = por %p150, %p151
      %p153 = scmp.ne.s32.totalorder %s144, %s145
      %p154 = scmp.eq.s32.totalorder %s29, 0
      %p155 = por %p153, %p154
      %p156 = scmp.ne.s32.totalorder %s144, %s145
      %p157 = scmp.eq.s32.totalorder %s30, 1
      %p158 = por %p156, %p157
      %p160 = scmp.ne.s32.totalorder %s145, %s159
      %p161 = scmp.eq.s32.totalorder %s30, 0
      %p162 = por %p160, %p161
      %s164 = sadd.s32 %s163, 1
      %p167 = scmp.eq.s32.totalorder %s24, 1
      %p168 = scmp.ne.s32.totalorder %s163, %s165
      %p169 = scmp.eq.s32.totalorder %s24, 0
      %p170 = por %p168, %p169
      %p171 = scmp.ne.s32.totalorder %s163, %s165
      %p172 = scmp.eq.s32.totalorder %s29, 1
      %p173 = por %p171, %p172
      %p174 = scmp.ne.s32.totalorder %s165, %s166
      %p175 = scmp.eq.s32.totalorder %s29, 0
      %p176 = por %p174, %p175
      %p177 = scmp.ne.s32.totalorder %s165, %s166
      %p178 = scmp.eq.s32.totalorder %s30, 1
      %p179 = por %p177, %p178
      %p181 = scmp.ne.s32.totalorder %s166, %s180
      %p182 = scmp.eq.s32.totalorder %s30, 0
      %p183 = por %p181, %p182
      %s185 = sadd.s32 %s184, 1
      %p188 = scmp.eq.s32.totalorder %s24, 1
      %p189 = scmp.ne.s32.totalorder %s184, %s186
      %p190 = scmp.eq.s32.totalorder %s24, 0
      %p191 = por %p189, %p190
      %p192 = scmp.ne.s32.totalorder %s184, %s186
      %p193 = scmp.eq.s32.totalorder %s29, 1
      %p194 = por %p192, %p193
      %p195 = scmp.ne.s32.totalorder %s186, %s187
      %p196 = scmp.eq.s32.totalorder %s29, 0
      %p197 = por %p195, %p196
      %p198 = scmp.ne.s32.totalorder %s186, %s187
      %p199 = scmp.eq.s32.totalorder %s30, 1
      %p200 = por %p198, %p199
      %p202 = scmp.ne.s32.totalorder %s187, %s201
      %p203 = scmp.eq.s32.totalorder %s30, 0
      %p204 = por %p202, %p203
      %s206 = sadd.s32 %s205, 1
      %p209 = scmp.eq.s32.totalorder %s24, 1
      %p210 = scmp.ne.s32.totalorder %s205, %s207
      %p211 = scmp.eq.s32.totalorder %s24, 0
      %p212 = por %p210, %p211
      %p213 = scmp.ne.s32.totalorder %s205, %s207
      %p214 = scmp.eq.s32.totalorder %s29, 1
      %p215 = por %p213, %p214
      %p216 = scmp.ne.s32.totalorder %s207, %s208
      %p217 = scmp.eq.s32.totalorder %s29, 0
      %p218 = por %p216, %p217
      %p219 = scmp.ne.s32.totalorder %s207, %s208
      %p220 = scmp.eq.s32.totalorder %s30, 1
      %p221 = por %p219, %p220
      %p223 = scmp.ne.s32.totalorder %s208, %s222
      %p224 = scmp.eq.s32.totalorder %s30, 0
      %p225 = por %p223, %p224
      %s226 = ssub.s32 %s24, %s31
      %p227 = scmp.eq.s32.totalorder %s226, 0
      %s229 = sadd.s32 %s228, 1
      %s230 = scalar_select %p227, %s228, %s229
      %p233 = pneg %p227
      %p234 = scmp.eq.s32.totalorder %s24, 1
      %p235 = por %p233, %p234
      %p236 = scmp.ne.s32.totalorder %s228, %s231
      %p237 = scmp.eq.s32.totalorder %s24, 0
      %p238 = por %p236, %p237
      %p239 = scmp.ne.s32.totalorder %s228, %s231
      %p240 = scmp.eq.s32.totalorder %s29, 1
      %p241 = por %p239, %p240
      %p242 = scmp.ne.s32.totalorder %s231, %s232
      %p243 = scmp.eq.s32.totalorder %s29, 0
      %p244 = por %p242, %p243
      %p245 = scmp.ne.s32.totalorder %s231, %s232
      %p246 = scmp.eq.s32.totalorder %s30, 1
      %p247 = por %p245, %p246
      %p249 = scmp.ne.s32.totalorder %s232, %s248
      %p250 = scmp.eq.s32.totalorder %s30, 0
      %p251 = por %p249, %p250
      %p252 = scmp.le.s32.totalorder 1, %s24
      %p253 = scmp.lt.s32.totalorder %s24, 3
      %p254 = pnand %p252, %p253
      %p255 = pneg %p254
      // Predicated region
      $region9: #{tpu_custom_call.1} parent=5 // pred_check
        _
      $region10: #{tpu_custom_call.1} parent=5 // pred_check_branch
        %257 = sbr.rel (%p254) target = $region12
      $region11: #{tpu_custom_call.1} parent=5 // pred_region
        %s258 = ssub.s32 %s24, 1
        // Predicated region
        $region13: #{tpu_custom_call.1} parent=11 // pred_check
          %p259 = pneg %p71
        $region14: #{tpu_custom_call.1} parent=11 // pred_check_branch
          %261 = sbr.rel (%p259) target = $region16
        $region15: #{tpu_custom_call.1} parent=11 // pred_region
          %263 = vsyncadd [#allocation6], 0
          %s265 = sshll.u32 %s1, 4
          %s266 = int_to_ptr.hbm [resolvable:$true] %s265
          %s267 = sshll.u32 [#allocation5], 4
          %s268 = int_to_ptr.vmem [resolvable:$true] %s267
          %270 = dma.hbm_to_vmem [thread:$0]  %s266, 1024, %s268, [#allocation6]
        $region16: #{tpu_custom_call.1} parent=11 // pred_fallthru
          _
        // Predicated region
        $region17: #{tpu_custom_call.1} parent=11 // pred_check
          %p271 = pneg %p92
        $region18: #{tpu_custom_call.1} parent=11 // pred_check_branch
          %273 = sbr.rel (%p271) target = $region20
        $region19: #{tpu_custom_call.1} parent=11 // pred_region
          %275 = vsyncadd [#allocation6], 0
          %s277 = sshll.u32 %s2, 4
          %s278 = int_to_ptr.hbm [resolvable:$true] %s277
          %s279 = sshll.u32 [#allocation7], 4
          %s280 = int_to_ptr.vmem [resolvable:$true] %s279
          %282 = dma.hbm_to_vmem [thread:$0]  %s278, 256, %s280, [#allocation6]
        $region20: #{tpu_custom_call.1} parent=11 // pred_fallthru
          _
        // Predicated region
        $region21: #{tpu_custom_call.1} parent=11 // pred_check
          %p283 = pneg %p113
        $region22: #{tpu_custom_call.1} parent=11 // pred_check_branch
          %285 = sbr.rel (%p283) target = $region24
        $region23: #{tpu_custom_call.1} parent=11 // pred_region
          %287 = vsyncadd [#allocation9], 0
          %s288 = sshll.u32 %s3, 4
          %s289 = int_to_ptr.hbm [resolvable:$true] %s288
          %s290 = sshll.u32 [#allocation8], 4
          %s291 = int_to_ptr.vmem [resolvable:$true] %s290
          %296 = dma.hbm_to_vmem [thread:$0]  %s289, 32768, %s291, [#allocation9], 128, 128, 8
        $region24: #{tpu_custom_call.1} parent=11 // pred_fallthru
          _
        // Predicated region
        $region25: #{tpu_custom_call.1} parent=11 // pred_check
          %p297 = pneg %p134
        $region26: #{tpu_custom_call.1} parent=11 // pred_check_branch
          %299 = sbr.rel (%p297) target = $region28
        $region27: #{tpu_custom_call.1} parent=11 // pred_region
          %301 = vsyncadd [#allocation9], 0
          %s303 = sshll.u32 %s4, 4
          %s304 = int_to_ptr.hbm [resolvable:$true] %s303
          %s305 = sshll.u32 [#allocation10], 4
          %s306 = int_to_ptr.vmem [resolvable:$true] %s305
          %308 = dma.hbm_to_vmem [thread:$0]  %s304, 16, %s306, [#allocation9]
        $region28: #{tpu_custom_call.1} parent=11 // pred_fallthru
          _
        // Predicated region
        $region29: #{tpu_custom_call.1} parent=11 // pred_check
          %p309 = pneg %p155
        $region30: #{tpu_custom_call.1} parent=11 // pred_check_branch
          %311 = sbr.rel (%p309) target = $region32
        $region31: #{tpu_custom_call.1} parent=11 // pred_region
          _
        $region32: #{tpu_custom_call.1} parent=11 // pred_fallthru
          _
        // Predicated region
        $region33: #{tpu_custom_call.1} parent=11 // pred_check
          %p312 = pneg %p176
        $region34: #{tpu_custom_call.1} parent=11 // pred_check_branch
          %314 = sbr.rel (%p312) target = $region36
        $region35: #{tpu_custom_call.1} parent=11 // pred_region
          %316 = vsyncadd [#allocation12], 0
          %s318 = sshll.u32 %s6, 4
          %s319 = int_to_ptr.hbm [resolvable:$true] %s318
          %s320 = sshll.u32 [#allocation11], 4
          %s321 = int_to_ptr.vmem [resolvable:$true] %s320
          %323 = dma.hbm_to_vmem [thread:$0]  %s319, 16, %s321, [#allocation12]
        $region36: #{tpu_custom_call.1} parent=11 // pred_fallthru
          _
        // Predicated region
        $region37: #{tpu_custom_call.1} parent=11 // pred_check
          %p324 = pneg %p197
        $region38: #{tpu_custom_call.1} parent=11 // pred_check_branch
          %326 = sbr.rel (%p324) target = $region40
        $region39: #{tpu_custom_call.1} parent=11 // pred_region
          _
        $region40: #{tpu_custom_call.1} parent=11 // pred_fallthru
          _
        // Predicated region
        $region41: #{tpu_custom_call.1} parent=11 // pred_check
          %p327 = pneg %p218
        $region42: #{tpu_custom_call.1} parent=11 // pred_check_branch
          %329 = sbr.rel (%p327) target = $region44
        $region43: #{tpu_custom_call.1} parent=11 // pred_region
          %331 = vsyncadd [#allocation12], 0
          %s333 = sshll.u32 %s8, 4
          %s334 = int_to_ptr.hbm [resolvable:$true] %s333
          %s335 = sshll.u32 [#allocation13], 4
          %s336 = int_to_ptr.vmem [resolvable:$true] %s335
          %338 = dma.hbm_to_vmem [thread:$0]  %s334, 16, %s336, [#allocation12]
        $region44: #{tpu_custom_call.1} parent=11 // pred_fallthru
          _
      $region12: #{tpu_custom_call.1} parent=5 // pred_fallthru
        _
      %p339 = scmp.lt.s32.totalorder %s24, 2
      // Predicated region
      $region45: #{tpu_custom_call.1} parent=5 // pred_check
        %p340 = pneg %p339
      $region46: #{tpu_custom_call.1} parent=5 // pred_check_branch
        %342 = sbr.rel (%p340) target = $region48
      $region47: #{tpu_custom_call.1} parent=5 // pred_region
        // Predicated region
        $region49: #{tpu_custom_call.1} parent=47 // pred_check
          %p343 = pneg %p44
        $region50: #{tpu_custom_call.1} parent=47 // pred_check_branch
          %345 = sbr.rel (%p343) target = $region52
        $region51: #{tpu_custom_call.1} parent=47 // pred_region
          %s346 = sand.u32 %s34, 1
          %s347 = scalar_lea.sflag [#allocation3], %s346
          %s348 = sand.u32 %s34, 1
          %s349 = smul.addr %s348, 1176
          %s350 = scalar_lea.vmem [#allocation2], %s349
          %352 = vsyncadd %s347, 0
          %s353 = smul.addr %s24, 147
          %s354 = smul.addr %s353, 8
          %s355 = scalar_lea.hbm %s0, %s354
          %s356 = sshll.u32 %s355, 4
          %s357 = int_to_ptr.hbm [resolvable:$true] %s356
          %s358 = sshll.u32 %s350, 4
          %s359 = int_to_ptr.vmem [resolvable:$true] %s358
          %364 = dma.hbm_to_vmem [thread:$0]  %s357, 18816, %s359, %s347, 128, 128, 8
        $region52: #{tpu_custom_call.1} parent=47 // pred_fallthru
          _
      $region48: #{tpu_custom_call.1} parent=5 // pred_fallthru
        _
      %p365 = scmp.le.s32.totalorder 1, %s24
      %p366 = scmp.lt.s32.totalorder %s24, 3
      %p367 = pnand %p365, %p366
      %p368 = pneg %p367
      // Predicated region
      $region53: #{tpu_custom_call.1} parent=5 // pred_check
        _
      $region54: #{tpu_custom_call.1} parent=5 // pred_check_branch
        %370 = sbr.rel (%p367) target = $region56
      $region55: #{tpu_custom_call.1} parent=5 // pred_region
        %s371 = ssub.s32 %s24, 1
        %s372 = sand.u32 %s37, 1
        %s373 = scalar_lea.sflag [#allocation3], %s372
        %s374 = sand.u32 %s37, 1
        %s375 = smul.addr %s374, 1176
        %s376 = scalar_lea.vmem [#allocation2], %s375
        // Predicated region
        $region57: #{tpu_custom_call.1} parent=55 // pred_check
          %p377 = pneg %p50
        $region58: #{tpu_custom_call.1} parent=55 // pred_check_branch
          %379 = sbr.rel (%p377) target = $region60
        $region59: #{tpu_custom_call.1} parent=55 // pred_region
          %381 = dma.done %s373, 18816
        $region60: #{tpu_custom_call.1} parent=55 // pred_fallthru
          _
        // Predicated region
        $region61: #{tpu_custom_call.1} parent=55 // pred_check
          %p382 = pneg %p71
        $region62: #{tpu_custom_call.1} parent=55 // pred_check_branch
          %384 = sbr.rel (%p382) target = $region64
        $region63: #{tpu_custom_call.1} parent=55 // pred_region
          %386 = dma.done [#allocation6], 1024
        $region64: #{tpu_custom_call.1} parent=55 // pred_fallthru
          _
        // Predicated region
        $region65: #{tpu_custom_call.1} parent=55 // pred_check
          %p387 = pneg %p92
        $region66: #{tpu_custom_call.1} parent=55 // pred_check_branch
          %389 = sbr.rel (%p387) target = $region68
        $region67: #{tpu_custom_call.1} parent=55 // pred_region
          %391 = dma.done [#allocation6], 256
        $region68: #{tpu_custom_call.1} parent=55 // pred_fallthru
          _
        // Predicated region
        $region69: #{tpu_custom_call.1} parent=55 // pred_check
          %p392 = pneg %p113
        $region70: #{tpu_custom_call.1} parent=55 // pred_check_branch
          %394 = sbr.rel (%p392) target = $region72
        $region71: #{tpu_custom_call.1} parent=55 // pred_region
          %396 = dma.done [#allocation9], 32768
        $region72: #{tpu_custom_call.1} parent=55 // pred_fallthru
          _
        // Predicated region
        $region73: #{tpu_custom_call.1} parent=55 // pred_check
          %p397 = pneg %p134
        $region74: #{tpu_custom_call.1} parent=55 // pred_check_branch
          %399 = sbr.rel (%p397) target = $region76
        $region75: #{tpu_custom_call.1} parent=55 // pred_region
          %401 = dma.done [#allocation9], 16
        $region76: #{tpu_custom_call.1} parent=55 // pred_fallthru
          _
        // Predicated region
        $region77: #{tpu_custom_call.1} parent=55 // pred_check
          %p402 = pneg %p176
        $region78: #{tpu_custom_call.1} parent=55 // pred_check_branch
          %404 = sbr.rel (%p402) target = $region80
        $region79: #{tpu_custom_call.1} parent=55 // pred_region
          %406 = dma.done [#allocation12], 16
        $region80: #{tpu_custom_call.1} parent=55 // pred_fallthru
          _
        // Predicated region
        $region81: #{tpu_custom_call.1} parent=55 // pred_check
          %p407 = pneg %p218
        $region82: #{tpu_custom_call.1} parent=55 // pred_check_branch
          %409 = sbr.rel (%p407) target = $region84
        $region83: #{tpu_custom_call.1} parent=55 // pred_region
          %411 = dma.done [#allocation12], 16
        $region84: #{tpu_custom_call.1} parent=55 // pred_fallthru
          _
        %s412 = sand.u32 %s37, 1
        %s413 = scalar_lea.sflag [#allocation3], %s412
        %s414 = sand.u32 %s37, 1
        %s415 = smul.addr %s414, 1176
        %s416 = scalar_lea.vmem [#allocation2], %s415
        %p417 = pneg %p50
        %p418 = pneg %p47
        %p419 = pneg %p71
        %p420 = pneg %p68
        %p421 = pneg %p92
        %p422 = pneg %p89
        %p423 = pneg %p113
        %p424 = pneg %p110
        %p425 = pneg %p134
        %p426 = pneg %p131
        %p427 = pneg %p155
        %p428 = pneg %p152
        %p429 = pneg %p176
        %p430 = pneg %p173
        %p431 = pneg %p197
        %p432 = pneg %p194
        %p433 = pneg %p218
        %p434 = pneg %p215
        %p435 = pneg %p244
        %p436 = pneg %p241
        %s437 = sand.u32 %s231, 1
        %s438 = scalar_lea.sflag [#allocation4], %s437
        %s439 = sand.u32 %s231, 1
        %s440 = scalar_lea.vmem [#allocation14], %s439
        %v441 = vld [vmem:[%s376] sm:$0xff]
        %v442 = vld [vmem:[%s376 + $0x8] sm:$0xff]
        %v443 = vld [vmem:[%s376 + $0x10] sm:$0xff]
        %v444 = vld [vmem:[%s376 + $0x18] sm:$0xff]
        %v445 = vld [vmem:[%s376 + $0x20] sm:$0xff]
        %v446 = vld [vmem:[%s376 + $0x28] sm:$0xff]
        %v447 = vld [vmem:[%s376 + $0x30] sm:$0xff]
        %v448 = vld [vmem:[%s376 + $0x38] sm:$0xff]
        %v449 = vld [vmem:[%s376 + $0x40] sm:$0xff]
        %v450 = vld [vmem:[%s376 + $0x48] sm:$0xff]
        %v451 = vld [vmem:[%s376 + $0x50] sm:$0xff]
        %v452 = vld [vmem:[%s376 + $0x58] sm:$0xff]
        %v453 = vld [vmem:[%s376 + $0x60] sm:$0xff]
        %v454 = vld [vmem:[%s376 + $0x68] sm:$0xff]
        %v455 = vld [vmem:[%s376 + $0x70] sm:$0xff]
        %v456 = vld [vmem:[%s376 + $0x78] sm:$0xff]
        %v457 = vld [vmem:[%s376 + $0x80] sm:$0xff]
        %v458 = vld [vmem:[%s376 + $0x88] sm:$0xff]
        %v459 = vld [vmem:[%s376 + $0x90] sm:$0xff]
        %v460 = vld [vmem:[%s376 + $0x98] sm:$0xff]
        %v461 = vld [vmem:[%s376 + $0xa0] sm:$0xff]
        %v462 = vld [vmem:[%s376 + $0xa8] sm:$0xff]
        %v463 = vld [vmem:[%s376 + $0xb0] sm:$0xff]
        %v464 = vld [vmem:[%s376 + $0xb8] sm:$0xff]
        %v465 = vld [vmem:[%s376 + $0xc0] sm:$0xff]
        %v466 = vld [vmem:[%s376 + $0xc8] sm:$0xff]
        %v467 = vld [vmem:[%s376 + $0xd0] sm:$0xff]
        %v468 = vld [vmem:[%s376 + $0xd8] sm:$0xff]
        %v469 = vld [vmem:[%s376 + $0xe0] sm:$0xff]
        %v470 = vld [vmem:[%s376 + $0xe8] sm:$0xff]
        %v471 = vld [vmem:[%s376 + $0xf0] sm:$0xff]
        %v472 = vld [vmem:[%s376 + $0xf8] sm:$0xff]
        %v473 = vld [vmem:[%s376 + $0x100] sm:$0xff]
        %v474 = vld [vmem:[%s376 + $0x108] sm:$0xff]
        %v475 = vld [vmem:[%s376 + $0x110] sm:$0xff]
        %v476 = vld [vmem:[%s376 + $0x118] sm:$0xff]
        %v477 = vld [vmem:[%s376 + $0x120] sm:$0xff]
        %v478 = vld [vmem:[%s376 + $0x128] sm:$0xff]
        %v479 = vld [vmem:[%s376 + $0x130] sm:$0xff]
        %v480 = vld [vmem:[%s376 + $0x138] sm:$0xff]
        %v481 = vld [vmem:[%s376 + $0x140] sm:$0xff]
        %v482 = vld [vmem:[%s376 + $0x148] sm:$0xff]
        %v483 = vld [vmem:[%s376 + $0x150] sm:$0xff]
        %v484 = vld [vmem:[%s376 + $0x158] sm:$0xff]
        %v485 = vld [vmem:[%s376 + $0x160] sm:$0xff]
        %v486 = vld [vmem:[%s376 + $0x168] sm:$0xff]
        %v487 = vld [vmem:[%s376 + $0x170] sm:$0xff]
        %v488 = vld [vmem:[%s376 + $0x178] sm:$0xff]
        %v489 = vld [vmem:[%s376 + $0x180] sm:$0xff]
        %v490 = vld [vmem:[%s376 + $0x188] sm:$0xff]
        %v491 = vld [vmem:[%s376 + $0x190] sm:$0xff]
        %v492 = vld [vmem:[%s376 + $0x198] sm:$0xff]
        %v493 = vld [vmem:[%s376 + $0x1a0] sm:$0xff]
        %v494 = vld [vmem:[%s376 + $0x1a8] sm:$0xff]
        %v495 = vld [vmem:[%s376 + $0x1b0] sm:$0xff]
        %v496 = vld [vmem:[%s376 + $0x1b8] sm:$0xff]
        %v497 = vld [vmem:[%s376 + $0x1c0] sm:$0xff]
        %v498 = vld [vmem:[%s376 + $0x1c8] sm:$0xff]
        %v499 = vld [vmem:[%s376 + $0x1d0] sm:$0xff]
        %v500 = vld [vmem:[%s376 + $0x1d8] sm:$0xff]
        %v501 = vld [vmem:[%s376 + $0x1e0] sm:$0xff]
        %v502 = vld [vmem:[%s376 + $0x1e8] sm:$0xff]
        %v503 = vld [vmem:[%s376 + $0x1f0] sm:$0xff]
        %v504 = vld [vmem:[%s376 + $0x1f8] sm:$0xff]
        %v505 = vld [vmem:[%s376 + $0x200] sm:$0xff]
        %v506 = vld [vmem:[%s376 + $0x208] sm:$0xff]
        %v507 = vld [vmem:[%s376 + $0x210] sm:$0xff]
        %v508 = vld [vmem:[%s376 + $0x218] sm:$0xff]
        %v509 = vld [vmem:[%s376 + $0x220] sm:$0xff]
        %v510 = vld [vmem:[%s376 + $0x228] sm:$0xff]
        %v511 = vld [vmem:[%s376 + $0x230] sm:$0xff]
        %v512 = vld [vmem:[%s376 + $0x238] sm:$0xff]
        %v513 = vld [vmem:[%s376 + $0x240] sm:$0xff]
        %v514 = vld [vmem:[%s376 + $0x248] sm:$0xff]
        %v515 = vld [vmem:[%s376 + $0x250] sm:$0xff]
        %v516 = vld [vmem:[%s376 + $0x258] sm:$0xff]
        %v517 = vld [vmem:[%s376 + $0x260] sm:$0xff]
        %v518 = vld [vmem:[%s376 + $0x268] sm:$0xff]
        %v519 = vld [vmem:[%s376 + $0x270] sm:$0xff]
        %v520 = vld [vmem:[%s376 + $0x278] sm:$0xff]
        %v521 = vld [vmem:[%s376 + $0x280] sm:$0xff]
        %v522 = vld [vmem:[%s376 + $0x288] sm:$0xff]
        %v523 = vld [vmem:[%s376 + $0x290] sm:$0xff]
        %v524 = vld [vmem:[%s376 + $0x298] sm:$0xff]
        %v525 = vld [vmem:[%s376 + $0x2a0] sm:$0xff]
        %v526 = vld [vmem:[%s376 + $0x2a8] sm:$0xff]
        %v527 = vld [vmem:[%s376 + $0x2b0] sm:$0xff]
        %v528 = vld [vmem:[%s376 + $0x2b8] sm:$0xff]
        %v529 = vld [vmem:[%s376 + $0x2c0] sm:$0xff]
        %v530 = vld [vmem:[%s376 + $0x2c8] sm:$0xff]
        %v531 = vld [vmem:[%s376 + $0x2d0] sm:$0xff]
        %v532 = vld [vmem:[%s376 + $0x2d8] sm:$0xff]
        %v533 = vld [vmem:[%s376 + $0x2e0] sm:$0xff]
        %v534 = vld [vmem:[%s376 + $0x2e8] sm:$0xff]
        %v535 = vld [vmem:[%s376 + $0x2f0] sm:$0xff]
        %v536 = vld [vmem:[%s376 + $0x2f8] sm:$0xff]
        %v537 = vld [vmem:[%s376 + $0x300] sm:$0xff]
        %v538 = vld [vmem:[%s376 + $0x308] sm:$0xff]
        %v539 = vld [vmem:[%s376 + $0x310] sm:$0xff]
        %v540 = vld [vmem:[%s376 + $0x318] sm:$0xff]
        %v541 = vld [vmem:[%s376 + $0x320] sm:$0xff]
        %v542 = vld [vmem:[%s376 + $0x328] sm:$0xff]
        %v543 = vld [vmem:[%s376 + $0x330] sm:$0xff]
        %v544 = vld [vmem:[%s376 + $0x338] sm:$0xff]
        %v545 = vld [vmem:[%s376 + $0x340] sm:$0xff]
        %v546 = vld [vmem:[%s376 + $0x348] sm:$0xff]
        %v547 = vld [vmem:[%s376 + $0x350] sm:$0xff]
        %v548 = vld [vmem:[%s376 + $0x358] sm:$0xff]
        %v549 = vld [vmem:[%s376 + $0x360] sm:$0xff]
        %v550 = vld [vmem:[%s376 + $0x368] sm:$0xff]
        %v551 = vld [vmem:[%s376 + $0x370] sm:$0xff]
        %v552 = vld [vmem:[%s376 + $0x378] sm:$0xff]
        %v553 = vld [vmem:[%s376 + $0x380] sm:$0xff]
        %v554 = vld [vmem:[%s376 + $0x388] sm:$0xff]
        %v555 = vld [vmem:[%s376 + $0x390] sm:$0xff]
        %v556 = vld [vmem:[%s376 + $0x398] sm:$0xff]
        %v557 = vld [vmem:[%s376 + $0x3a0] sm:$0xff]
        %v558 = vld [vmem:[%s376 + $0x3a8] sm:$0xff]
        %v559 = vld [vmem:[%s376 + $0x3b0] sm:$0xff]
        %v560 = vld [vmem:[%s376 + $0x3b8] sm:$0xff]
        %v561 = vld [vmem:[%s376 + $0x3c0] sm:$0xff]
        %v562 = vld [vmem:[%s376 + $0x3c8] sm:$0xff]
        %v563 = vld [vmem:[%s376 + $0x3d0] sm:$0xff]
        %v564 = vld [vmem:[%s376 + $0x3d8] sm:$0xff]
        %v565 = vld [vmem:[%s376 + $0x3e0] sm:$0xff]
        %v566 = vld [vmem:[%s376 + $0x3e8] sm:$0xff]
        %v567 = vld [vmem:[%s376 + $0x3f0] sm:$0xff]
        %v568 = vld [vmem:[%s376 + $0x3f8] sm:$0xff]
        %v569 = vld [vmem:[%s376 + $0x400] sm:$0xff]
        %v570 = vld [vmem:[%s376 + $0x408] sm:$0xff]
        %v571 = vld [vmem:[%s376 + $0x410] sm:$0xff]
        %v572 = vld [vmem:[%s376 + $0x418] sm:$0xff]
        %v573 = vld [vmem:[%s376 + $0x420] sm:$0xff]
        %v574 = vld [vmem:[%s376 + $0x428] sm:$0xff]
        %v575 = vld [vmem:[%s376 + $0x430] sm:$0xff]
        %v576 = vld [vmem:[%s376 + $0x438] sm:$0xff]
        %v577 = vld [vmem:[%s376 + $0x440] sm:$0xff]
        %v578 = vld [vmem:[%s376 + $0x448] sm:$0xff]
        %v579 = vld [vmem:[%s376 + $0x450] sm:$0xff]
        %v580 = vld [vmem:[%s376 + $0x458] sm:$0xff]
        %v581 = vld [vmem:[%s376 + $0x460] sm:$0xff]
        %v582 = vld [vmem:[%s376 + $0x468] sm:$0xff]
        %v583 = vld [vmem:[%s376 + $0x470] sm:$0xff]
        %v584 = vld [vmem:[%s376 + $0x478] sm:$0xff]
        %v585 = vld [vmem:[%s376 + $0x480] sm:$0xff]
        %v586 = vld [vmem:[%s376 + $0x488] sm:$0xff]
        %v587 = vld [vmem:[%s376 + $0x490] sm:$0xff]
        %v588 = vadd.f32 %v441, %v442
        %v589 = vadd.f32 %v588, %v443
        %v590 = vadd.f32 %v589, %v444
        %v591 = vadd.f32 %v590, %v445
        %v592 = vadd.f32 %v591, %v446
        %v593 = vadd.f32 %v592, %v447
        %v594 = vadd.f32 %v593, %v448
        %v595 = vadd.f32 %v594, %v449
        %v596 = vadd.f32 %v595, %v450
        %v597 = vadd.f32 %v596, %v451
        %v598 = vadd.f32 %v597, %v452
        %v599 = vadd.f32 %v598, %v453
        %v600 = vadd.f32 %v599, %v454
        %v601 = vadd.f32 %v600, %v455
        %v602 = vadd.f32 %v601, %v456
        %v603 = vadd.f32 %v602, %v457
        %v604 = vadd.f32 %v603, %v458
        %v605 = vadd.f32 %v604, %v459
        %v606 = vadd.f32 %v605, %v460
        %v607 = vadd.f32 %v606, %v461
        %v608 = vadd.f32 %v607, %v462
        %v609 = vadd.f32 %v608, %v463
        %v610 = vadd.f32 %v609, %v464
        %v611 = vadd.f32 %v610, %v465
        %v612 = vadd.f32 %v611, %v466
        %v613 = vadd.f32 %v612, %v467
        %v614 = vadd.f32 %v613, %v468
        %v615 = vadd.f32 %v614, %v469
        %v616 = vadd.f32 %v615, %v470
        %v617 = vadd.f32 %v616, %v471
        %v618 = vadd.f32 %v617, %v472
        %v619 = vadd.f32 %v618, %v473
        %v620 = vadd.f32 %v619, %v474
        %v621 = vadd.f32 %v620, %v475
        %v622 = vadd.f32 %v621, %v476
        %v623 = vadd.f32 %v622, %v477
        %v624 = vadd.f32 %v623, %v478
        %v625 = vadd.f32 %v624, %v479
        %v626 = vadd.f32 %v625, %v480
        %v627 = vadd.f32 %v626, %v481
        %v628 = vadd.f32 %v627, %v482
        %v629 = vadd.f32 %v628, %v483
        %v630 = vadd.f32 %v629, %v484
        %v631 = vadd.f32 %v630, %v485
        %v632 = vadd.f32 %v631, %v486
        %v633 = vadd.f32 %v632, %v487
        %v634 = vadd.f32 %v633, %v488
        %v635 = vadd.f32 %v634, %v489
        %v636 = vrot.slane %v635, 4
        %v637 = vadd.f32 %v635, %v636
        %v638 = vrot.slane %v637, 2
        %v639 = vadd.f32 %v637, %v638
        %v640 = vrot.slane %v639, 1
        %v641 = vadd.f32 %v639, %v640
        %v642 = vadd.f32 %v490, %v491
        %v643 = vadd.f32 %v642, %v492
        %v644 = vadd.f32 %v643, %v493
        %v645 = vadd.f32 %v644, %v494
        %v646 = vadd.f32 %v645, %v495
        %v647 = vadd.f32 %v646, %v496
        %v648 = vadd.f32 %v647, %v497
        %v649 = vadd.f32 %v648, %v498
        %v650 = vadd.f32 %v649, %v499
        %v651 = vadd.f32 %v650, %v500
        %v652 = vadd.f32 %v651, %v501
        %v653 = vadd.f32 %v652, %v502
        %v654 = vadd.f32 %v653, %v503
        %v655 = vadd.f32 %v654, %v504
        %v656 = vadd.f32 %v655, %v505
        %v657 = vadd.f32 %v656, %v506
        %v658 = vadd.f32 %v657, %v507
        %v659 = vadd.f32 %v658, %v508
        %v660 = vadd.f32 %v659, %v509
        %v661 = vadd.f32 %v660, %v510
        %v662 = vadd.f32 %v661, %v511
        %v663 = vadd.f32 %v662, %v512
        %v664 = vadd.f32 %v663, %v513
        %v665 = vadd.f32 %v664, %v514
        %v666 = vadd.f32 %v665, %v515
        %v667 = vadd.f32 %v666, %v516
        %v668 = vadd.f32 %v667, %v517
        %v669 = vadd.f32 %v668, %v518
        %v670 = vadd.f32 %v669, %v519
        %v671 = vadd.f32 %v670, %v520
        %v672 = vadd.f32 %v671, %v521
        %v673 = vadd.f32 %v672, %v522
        %v674 = vadd.f32 %v673, %v523
        %v675 = vadd.f32 %v674, %v524
        %v676 = vadd.f32 %v675, %v525
        %v677 = vadd.f32 %v676, %v526
        %v678 = vadd.f32 %v677, %v527
        %v679 = vadd.f32 %v678, %v528
        %v680 = vadd.f32 %v679, %v529
        %v681 = vadd.f32 %v680, %v530
        %v682 = vadd.f32 %v681, %v531
        %v683 = vadd.f32 %v682, %v532
        %v684 = vadd.f32 %v683, %v533
        %v685 = vadd.f32 %v684, %v534
        %v686 = vadd.f32 %v685, %v535
        %v687 = vadd.f32 %v686, %v536
        %v688 = vadd.f32 %v687, %v537
        %v689 = vadd.f32 %v688, %v538
        %v690 = vrot.slane %v689, 4
        %v691 = vadd.f32 %v689, %v690
        %v692 = vrot.slane %v691, 2
        %v693 = vadd.f32 %v691, %v692
        %v694 = vrot.slane %v693, 1
        %v695 = vadd.f32 %v693, %v694
        %v696 = vadd.f32 %v539, %v540
        %v697 = vadd.f32 %v696, %v541
        %v698 = vadd.f32 %v697, %v542
        %v699 = vadd.f32 %v698, %v543
        %v700 = vadd.f32 %v699, %v544
        %v701 = vadd.f32 %v700, %v545
        %v702 = vadd.f32 %v701, %v546
        %v703 = vadd.f32 %v702, %v547
        %v704 = vadd.f32 %v703, %v548
        %v705 = vadd.f32 %v704, %v549
        %v706 = vadd.f32 %v705, %v550
        %v707 = vadd.f32 %v706, %v551
        %v708 = vadd.f32 %v707, %v552
        %v709 = vadd.f32 %v708, %v553
        %v710 = vadd.f32 %v709, %v554
        %v711 = vadd.f32 %v710, %v555
        %v712 = vadd.f32 %v711, %v556
        %v713 = vadd.f32 %v712, %v557
        %v714 = vadd.f32 %v713, %v558
        %v715 = vadd.f32 %v714, %v559
        %v716 = vadd.f32 %v715, %v560
        %v717 = vadd.f32 %v716, %v561
        %v718 = vadd.f32 %v717, %v562
        %v719 = vadd.f32 %v718, %v563
        %v720 = vadd.f32 %v719, %v564
        %v721 = vadd.f32 %v720, %v565
        %v722 = vadd.f32 %v721, %v566
        %v723 = vadd.f32 %v722, %v567
        %v724 = vadd.f32 %v723, %v568
        %v725 = vadd.f32 %v724, %v569
        %v726 = vadd.f32 %v725, %v570
        %v727 = vadd.f32 %v726, %v571
        %v728 = vadd.f32 %v727, %v572
        %v729 = vadd.f32 %v728, %v573
        %v730 = vadd.f32 %v729, %v574
        %v731 = vadd.f32 %v730, %v575
        %v732 = vadd.f32 %v731, %v576
        %v733 = vadd.f32 %v732, %v577
        %v734 = vadd.f32 %v733, %v578
        %v735 = vadd.f32 %v734, %v579
        %v736 = vadd.f32 %v735, %v580
        %v737 = vadd.f32 %v736, %v581
        %v738 = vadd.f32 %v737, %v582
        %v739 = vadd.f32 %v738, %v583
        %v740 = vadd.f32 %v739, %v584
        %v741 = vadd.f32 %v740, %v585
        %v742 = vadd.f32 %v741, %v586
        %v743 = vadd.f32 %v742, %v587
        %v744 = vrot.slane %v743, 4
        %v745 = vadd.f32 %v743, %v744
        %v746 = vrot.slane %v745, 2
        %v747 = vadd.f32 %v745, %v746
        %v748 = vrot.slane %v747, 1
        %v749 = vadd.f32 %v747, %v748
        %vm753 = vcmask 1041409
        %v754 = vsel %vm753, %v695, %v641
        %vm755 = vcmask 1042434
        %v756 = vsel %vm755, %v749, %v754
        %vm758 = vcmask 1042432
        %v759 = vsel %vm758, %v756, 0.0
        %760 = vadd.xlane.f32.xlu0 %v759
        %v761 = vpop.xlane.xlu0 %760
        %v762 = vmul.f32 %v761, 1.9929847e-05
        %v763 = vld [vmem:[#allocation7] sm:$0xff]
        %v764 = vld [vmem:[#allocation7 + $0x8] sm:$0xff]
        %v765 = vld [vmem:[#allocation5] ss:$4 sm:$0xff]
        %s766 = scalar_lea.vmem [#allocation5], 32
        %v767 = vld [vmem:[%s766] ss:$4 sm:$0xff]
        %v770 = vperm.slane %v765, 0
        %v771 = vperm.slane %v765, 1
        %v772 = vperm.slane %v765, 2
        %v773 = vperm.slane %v765, 3
        %v774 = vperm.slane %v765, 4
        %v775 = vperm.slane %v765, 5
        %v776 = vperm.slane %v765, 6
        %v777 = vperm.slane %v765, 7
        %v778 = vperm.slane %v767, 0
        %v779 = vperm.slane %v767, 1
        %v780 = vperm.slane %v767, 2
        %v781 = vperm.slane %v767, 3
        %v782 = vperm.slane %v767, 4
        %v783 = vperm.slane %v767, 5
        %v784 = vperm.slane %v767, 6
        %v785 = vperm.slane %v767, 7
        %v802 = vmul.f32 %v762, %v770
        %v803 = vmul.f32 %v762, %v771
        %v804 = vmul.f32 %v762, %v772
        %v805 = vmul.f32 %v762, %v773
        %v806 = vmul.f32 %v762, %v774
        %v807 = vmul.f32 %v762, %v775
        %v808 = vmul.f32 %v762, %v776
        %v809 = vmul.f32 %v762, %v777
        %v810 = vmul.f32 %v762, %v778
        %v811 = vmul.f32 %v762, %v779
        %v812 = vmul.f32 %v762, %v780
        %v813 = vmul.f32 %v762, %v781
        %v814 = vmul.f32 %v762, %v782
        %v815 = vmul.f32 %v762, %v783
        %v816 = vmul.f32 %v762, %v784
        %v817 = vmul.f32 %v762, %v785
        %v834 = vrot.slane %v803, 7
        %v835 = vrot.slane %v804, 6
        %v836 = vrot.slane %v805, 5
        %v837 = vrot.slane %v806, 4
        %v838 = vrot.slane %v807, 3
        %v839 = vrot.slane %v808, 2
        %v840 = vrot.slane %v809, 1
        %v841 = vrot.slane %v811, 7
        %v842 = vrot.slane %v812, 6
        %v843 = vrot.slane %v813, 5
        %v844 = vrot.slane %v814, 4
        %v845 = vrot.slane %v815, 3
        %v846 = vrot.slane %v816, 2
        %v847 = vrot.slane %v817, 1
        %vm848 = vcmask 1040384
        %v849 = vsel %vm848, %v802, %v834
        %v850 = vsel %vm755, %v835, %v836
        %vm851 = vcmask 1041408
        %v852 = vsel %vm851, %v849, %v850
        %vm853 = vcmask 1044484
        %v854 = vsel %vm853, %v837, %v838
        %vm855 = vcmask 1046534
        %v856 = vsel %vm855, %v839, %v840
        %vm857 = vcmask 1045508
        %v858 = vsel %vm857, %v854, %v856
        %vm859 = vcmask 1043456
        %v860 = vsel %vm859, %v852, %v858
        %v861 = vsel %vm848, %v810, %v841
        %v862 = vsel %vm755, %v842, %v843
        %v863 = vsel %vm851, %v861, %v862
        %v864 = vsel %vm853, %v844, %v845
        %v865 = vsel %vm855, %v846, %v847
        %v866 = vsel %vm857, %v864, %v865
        %v867 = vsel %vm859, %v863, %v866
        %v870 = vadd.f32 %v763, %v860
        %v871 = vadd.f32 %v764, %v867
        %s872 = scalar_lea.vmem [#allocation5], 1
        %v873 = vld [vmem:[%s872] ss:$4 sm:$0xff]
        %s874 = scalar_lea.vmem [#allocation5], 33
        %v875 = vld [vmem:[%s874] ss:$4 sm:$0xff]
        %v878 = vperm.slane %v873, 0
        %v879 = vperm.slane %v873, 1
        %v880 = vperm.slane %v873, 2
        %v881 = vperm.slane %v873, 3
        %v882 = vperm.slane %v873, 4
        %v883 = vperm.slane %v873, 5
        %v884 = vperm.slane %v873, 6
        %v885 = vperm.slane %v873, 7
        %v886 = vperm.slane %v875, 0
        %v887 = vperm.slane %v875, 1
        %v888 = vperm.slane %v875, 2
        %v889 = vperm.slane %v875, 3
        %v890 = vperm.slane %v875, 4
        %v891 = vperm.slane %v875, 5
        %v892 = vperm.slane %v875, 6
        %v893 = vperm.slane %v875, 7
        %v910 = vmul.f32 %v762, %v878
        %v911 = vmul.f32 %v762, %v879
        %v912 = vmul.f32 %v762, %v880
        %v913 = vmul.f32 %v762, %v881
        %v914 = vmul.f32 %v762, %v882
        %v915 = vmul.f32 %v762, %v883
        %v916 = vmul.f32 %v762, %v884
        %v917 = vmul.f32 %v762, %v885
        %v918 = vmul.f32 %v762, %v886
        %v919 = vmul.f32 %v762, %v887
        %v920 = vmul.f32 %v762, %v888
        %v921 = vmul.f32 %v762, %v889
        %v922 = vmul.f32 %v762, %v890
        %v923 = vmul.f32 %v762, %v891
        %v924 = vmul.f32 %v762, %v892
        %v925 = vmul.f32 %v762, %v893
        %942 = vst [vmem:[#allocation1] sm:$0xff] %v910
        %943 = vst [vmem:[#allocation1 + $0x9] sm:$0xff] %v911
        %944 = vst [vmem:[#allocation1 + $0x12] sm:$0xff] %v912
        %945 = vst [vmem:[#allocation1 + $0x1b] sm:$0xff] %v913
        %946 = vst [vmem:[#allocation1 + $0x24] sm:$0xff] %v914
        %947 = vst [vmem:[#allocation1 + $0x2d] sm:$0xff] %v915
        %948 = vst [vmem:[#allocation1 + $0x36] sm:$0xff] %v916
        %949 = vst [vmem:[#allocation1 + $0x3f] sm:$0xff] %v917
        %s950 = scalar_lea.vmem [#allocation1], 1
        %v951 = vld [vmem:[%s950] ss:$9 sm:$0xff]
        %952 = vst [vmem:[#allocation1] sm:$0xff] %v918
        %953 = vst [vmem:[#allocation1 + $0x9] sm:$0xff] %v919
        %954 = vst [vmem:[#allocation1 + $0x12] sm:$0xff] %v920
        %955 = vst [vmem:[#allocation1 + $0x1b] sm:$0xff] %v921
        %956 = vst [vmem:[#allocation1 + $0x24] sm:$0xff] %v922
        %957 = vst [vmem:[#allocation1 + $0x2d] sm:$0xff] %v923
        %958 = vst [vmem:[#allocation1 + $0x36] sm:$0xff] %v924
        %959 = vst [vmem:[#allocation1 + $0x3f] sm:$0xff] %v925
        %v960 = vld [vmem:[%s950] ss:$9 sm:$0xff]
        %v963 = vadd.f32 %v870, %v951
        %v964 = vadd.f32 %v871, %v960
        %s965 = scalar_lea.vmem [#allocation5], 2
        %v966 = vld [vmem:[%s965] ss:$4 sm:$0xff]
        %s967 = scalar_lea.vmem [#allocation5], 34
        %v968 = vld [vmem:[%s967] ss:$4 sm:$0xff]
        %v971 = vperm.slane %v966, 0
        %v972 = vperm.slane %v966, 1
        %v973 = vperm.slane %v966, 2
        %v974 = vperm.slane %v966, 3
        %v975 = vperm.slane %v966, 4
        %v976 = vperm.slane %v966, 5
        %v977 = vperm.slane %v966, 6
        %v978 = vperm.slane %v966, 7
        %v979 = vperm.slane %v968, 0
        %v980 = vperm.slane %v968, 1
        %v981 = vperm.slane %v968, 2
        %v982 = vperm.slane %v968, 3
        %v983 = vperm.slane %v968, 4
        %v984 = vperm.slane %v968, 5
        %v985 = vperm.slane %v968, 6
        %v986 = vperm.slane %v968, 7
        %v1003 = vmul.f32 %v762, %v971
        %v1004 = vmul.f32 %v762, %v972
        %v1005 = vmul.f32 %v762, %v973
        %v1006 = vmul.f32 %v762, %v974
        %v1007 = vmul.f32 %v762, %v975
        %v1008 = vmul.f32 %v762, %v976
        %v1009 = vmul.f32 %v762, %v977
        %v1010 = vmul.f32 %v762, %v978
        %v1011 = vmul.f32 %v762, %v979
        %v1012 = vmul.f32 %v762, %v980
        %v1013 = vmul.f32 %v762, %v981
        %v1014 = vmul.f32 %v762, %v982
        %v1015 = vmul.f32 %v762, %v983
        %v1016 = vmul.f32 %v762, %v984
        %v1017 = vmul.f32 %v762, %v985
        %v1018 = vmul.f32 %v762, %v986
        %1035 = vst [vmem:[#allocation1] sm:$0xff] %v1003
        %1036 = vst [vmem:[#allocation1 + $0x9] sm:$0xff] %v1004
        %1037 = vst [vmem:[#allocation1 + $0x12] sm:$0xff] %v1005
        %1038 = vst [vmem:[#allocation1 + $0x1b] sm:$0xff] %v1006
        %1039 = vst [vmem:[#allocation1 + $0x24] sm:$0xff] %v1007
        %1040 = vst [vmem:[#allocation1 + $0x2d] sm:$0xff] %v1008
        %1041 = vst [vmem:[#allocation1 + $0x36] sm:$0xff] %v1009
        %1042 = vst [vmem:[#allocation1 + $0x3f] sm:$0xff] %v1010
        %s1043 = scalar_lea.vmem [#allocation1], 2
        %v1044 = vld [vmem:[%s1043] ss:$9 sm:$0xff]
        %1045 = vst [vmem:[#allocation1] sm:$0xff] %v1011
        %1046 = vst [vmem:[#allocation1 + $0x9] sm:$0xff] %v1012
        %1047 = vst [vmem:[#allocation1 + $0x12] sm:$0xff] %v1013
        %1048 = vst [vmem:[#allocation1 + $0x1b] sm:$0xff] %v1014
        %1049 = vst [vmem:[#allocation1 + $0x24] sm:$0xff] %v1015
        %1050 = vst [vmem:[#allocation1 + $0x2d] sm:$0xff] %v1016
        %1051 = vst [vmem:[#allocation1 + $0x36] sm:$0xff] %v1017
        %1052 = vst [vmem:[#allocation1 + $0x3f] sm:$0xff] %v1018
        %v1053 = vld [vmem:[%s1043] ss:$9 sm:$0xff]
        %v1056 = vadd.f32 %v963, %v1044
        %v1057 = vadd.f32 %v964, %v1053
        %v1058 = vmax.f32 %v1056, 0.0
        %v1059 = vmax.f32 %v1057, 0.0
        %v1060 = vld [vmem:[#allocation8] sm:$0xff]
        %v1061 = vld [vmem:[#allocation8 + $0x8] sm:$0xff]
        %v1062 = vld [vmem:[#allocation8 + $0x10] sm:$0xff]
        %v1063 = vld [vmem:[#allocation8 + $0x18] sm:$0xff]
        %v1064 = vld [vmem:[#allocation8 + $0x20] sm:$0xff]
        %v1065 = vld [vmem:[#allocation8 + $0x28] sm:$0xff]
        %v1066 = vld [vmem:[#allocation8 + $0x30] sm:$0xff]
        %v1067 = vld [vmem:[#allocation8 + $0x38] sm:$0xff]
        %v1068 = vld [vmem:[#allocation8 + $0x40] sm:$0xff]
        %v1069 = vld [vmem:[#allocation8 + $0x48] sm:$0xff]
        %v1070 = vld [vmem:[#allocation8 + $0x50] sm:$0xff]
        %v1071 = vld [vmem:[#allocation8 + $0x58] sm:$0xff]
        %v1072 = vld [vmem:[#allocation8 + $0x60] sm:$0xff]
        %v1073 = vld [vmem:[#allocation8 + $0x68] sm:$0xff]
        %v1074 = vld [vmem:[#allocation8 + $0x70] sm:$0xff]
        %v1075 = vld [vmem:[#allocation8 + $0x78] sm:$0xff]
        %v1076 = vld [vmem:[#allocation8 + $0x80] sm:$0xff]
        %v1077 = vld [vmem:[#allocation8 + $0x88] sm:$0xff]
        %v1078 = vld [vmem:[#allocation8 + $0x90] sm:$0xff]
        %v1079 = vld [vmem:[#allocation8 + $0x98] sm:$0xff]
        %v1080 = vld [vmem:[#allocation8 + $0xa0] sm:$0xff]
        %v1081 = vld [vmem:[#allocation8 + $0xa8] sm:$0xff]
        %v1082 = vld [vmem:[#allocation8 + $0xb0] sm:$0xff]
        %v1083 = vld [vmem:[#allocation8 + $0xb8] sm:$0xff]
        %v1084 = vld [vmem:[#allocation8 + $0xc0] sm:$0xff]
        %v1085 = vld [vmem:[#allocation8 + $0xc8] sm:$0xff]
        %v1086 = vld [vmem:[#allocation8 + $0xd0] sm:$0xff]
        %v1087 = vld [vmem:[#allocation8 + $0xd8] sm:$0xff]
        %v1088 = vld [vmem:[#allocation8 + $0xe0] sm:$0xff]
        %v1089 = vld [vmem:[#allocation8 + $0xe8] sm:$0xff]
        %v1090 = vld [vmem:[#allocation8 + $0xf0] sm:$0xff]
        %v1091 = vld [vmem:[#allocation8 + $0xf8] sm:$0xff]
        %v1092 = vld [vmem:[#allocation8 + $0x100] sm:$0xff]
        %v1093 = vld [vmem:[#allocation8 + $0x108] sm:$0xff]
        %v1094 = vld [vmem:[#allocation8 + $0x110] sm:$0xff]
        %v1095 = vld [vmem:[#allocation8 + $0x118] sm:$0xff]
        %v1096 = vld [vmem:[#allocation8 + $0x120] sm:$0xff]
        %v1097 = vld [vmem:[#allocation8 + $0x128] sm:$0xff]
        %v1098 = vld [vmem:[#allocation8 + $0x130] sm:$0xff]
        %v1099 = vld [vmem:[#allocation8 + $0x138] sm:$0xff]
        %v1100 = vld [vmem:[#allocation8 + $0x140] sm:$0xff]
        %v1101 = vld [vmem:[#allocation8 + $0x148] sm:$0xff]
        %v1102 = vld [vmem:[#allocation8 + $0x150] sm:$0xff]
        %v1103 = vld [vmem:[#allocation8 + $0x158] sm:$0xff]
        %v1104 = vld [vmem:[#allocation8 + $0x160] sm:$0xff]
        %v1105 = vld [vmem:[#allocation8 + $0x168] sm:$0xff]
        %v1106 = vld [vmem:[#allocation8 + $0x170] sm:$0xff]
        %v1107 = vld [vmem:[#allocation8 + $0x178] sm:$0xff]
        %v1108 = vld [vmem:[#allocation8 + $0x180] sm:$0xff]
        %v1109 = vld [vmem:[#allocation8 + $0x188] sm:$0xff]
        %v1110 = vld [vmem:[#allocation8 + $0x190] sm:$0xff]
        %v1111 = vld [vmem:[#allocation8 + $0x198] sm:$0xff]
        %v1112 = vld [vmem:[#allocation8 + $0x1a0] sm:$0xff]
        %v1113 = vld [vmem:[#allocation8 + $0x1a8] sm:$0xff]
        %v1114 = vld [vmem:[#allocation8 + $0x1b0] sm:$0xff]
        %v1115 = vld [vmem:[#allocation8 + $0x1b8] sm:$0xff]
        %v1116 = vld [vmem:[#allocation8 + $0x1c0] sm:$0xff]
        %v1117 = vld [vmem:[#allocation8 + $0x1c8] sm:$0xff]
        %v1118 = vld [vmem:[#allocation8 + $0x1d0] sm:$0xff]
        %v1119 = vld [vmem:[#allocation8 + $0x1d8] sm:$0xff]
        %v1120 = vld [vmem:[#allocation8 + $0x1e0] sm:$0xff]
        %v1121 = vld [vmem:[#allocation8 + $0x1e8] sm:$0xff]
        %v1122 = vld [vmem:[#allocation8 + $0x1f0] sm:$0xff]
        %v1123 = vld [vmem:[#allocation8 + $0x1f8] sm:$0xff]
        %v1124 = vld [vmem:[#allocation8 + $0x200] sm:$0xff]
        %v1125 = vld [vmem:[#allocation8 + $0x208] sm:$0xff]
        %v1126 = vld [vmem:[#allocation8 + $0x210] sm:$0xff]
        %v1127 = vld [vmem:[#allocation8 + $0x218] sm:$0xff]
        %v1128 = vld [vmem:[#allocation8 + $0x220] sm:$0xff]
        %v1129 = vld [vmem:[#allocation8 + $0x228] sm:$0xff]
        %v1130 = vld [vmem:[#allocation8 + $0x230] sm:$0xff]
        %v1131 = vld [vmem:[#allocation8 + $0x238] sm:$0xff]
        %v1132 = vld [vmem:[#allocation8 + $0x240] sm:$0xff]
        %v1133 = vld [vmem:[#allocation8 + $0x248] sm:$0xff]
        %v1134 = vld [vmem:[#allocation8 + $0x250] sm:$0xff]
        %v1135 = vld [vmem:[#allocation8 + $0x258] sm:$0xff]
        %v1136 = vld [vmem:[#allocation8 + $0x260] sm:$0xff]
        %v1137 = vld [vmem:[#allocation8 + $0x268] sm:$0xff]
        %v1138 = vld [vmem:[#allocation8 + $0x270] sm:$0xff]
        %v1139 = vld [vmem:[#allocation8 + $0x278] sm:$0xff]
        %v1140 = vld [vmem:[#allocation8 + $0x280] sm:$0xff]
        %v1141 = vld [vmem:[#allocation8 + $0x288] sm:$0xff]
        %v1142 = vld [vmem:[#allocation8 + $0x290] sm:$0xff]
        %v1143 = vld [vmem:[#allocation8 + $0x298] sm:$0xff]
        %v1144 = vld [vmem:[#allocation8 + $0x2a0] sm:$0xff]
        %v1145 = vld [vmem:[#allocation8 + $0x2a8] sm:$0xff]
        %v1146 = vld [vmem:[#allocation8 + $0x2b0] sm:$0xff]
        %v1147 = vld [vmem:[#allocation8 + $0x2b8] sm:$0xff]
        %v1148 = vld [vmem:[#allocation8 + $0x2c0] sm:$0xff]
        %v1149 = vld [vmem:[#allocation8 + $0x2c8] sm:$0xff]
        %v1150 = vld [vmem:[#allocation8 + $0x2d0] sm:$0xff]
        %v1151 = vld [vmem:[#allocation8 + $0x2d8] sm:$0xff]
        %v1152 = vld [vmem:[#allocation8 + $0x2e0] sm:$0xff]
        %v1153 = vld [vmem:[#allocation8 + $0x2e8] sm:$0xff]
        %v1154 = vld [vmem:[#allocation8 + $0x2f0] sm:$0xff]
        %v1155 = vld [vmem:[#allocation8 + $0x2f8] sm:$0xff]
        %v1156 = vld [vmem:[#allocation8 + $0x300] sm:$0xff]
        %v1157 = vld [vmem:[#allocation8 + $0x308] sm:$0xff]
        %v1158 = vld [vmem:[#allocation8 + $0x310] sm:$0xff]
        %v1159 = vld [vmem:[#allocation8 + $0x318] sm:$0xff]
        %v1160 = vld [vmem:[#allocation8 + $0x320] sm:$0xff]
        %v1161 = vld [vmem:[#allocation8 + $0x328] sm:$0xff]
        %v1162 = vld [vmem:[#allocation8 + $0x330] sm:$0xff]
        %v1163 = vld [vmem:[#allocation8 + $0x338] sm:$0xff]
        %v1164 = vld [vmem:[#allocation8 + $0x340] sm:$0xff]
        %v1165 = vld [vmem:[#allocation8 + $0x348] sm:$0xff]
        %v1166 = vld [vmem:[#allocation8 + $0x350] sm:$0xff]
        %v1167 = vld [vmem:[#allocation8 + $0x358] sm:$0xff]
        %v1168 = vld [vmem:[#allocation8 + $0x360] sm:$0xff]
        %v1169 = vld [vmem:[#allocation8 + $0x368] sm:$0xff]
        %v1170 = vld [vmem:[#allocation8 + $0x370] sm:$0xff]
        %v1171 = vld [vmem:[#allocation8 + $0x378] sm:$0xff]
        %v1172 = vld [vmem:[#allocation8 + $0x380] sm:$0xff]
        %v1173 = vld [vmem:[#allocation8 + $0x388] sm:$0xff]
        %v1174 = vld [vmem:[#allocation8 + $0x390] sm:$0xff]
        %v1175 = vld [vmem:[#allocation8 + $0x398] sm:$0xff]
        %v1176 = vld [vmem:[#allocation8 + $0x3a0] sm:$0xff]
        %v1177 = vld [vmem:[#allocation8 + $0x3a8] sm:$0xff]
        %v1178 = vld [vmem:[#allocation8 + $0x3b0] sm:$0xff]
        %v1179 = vld [vmem:[#allocation8 + $0x3b8] sm:$0xff]
        %v1180 = vld [vmem:[#allocation8 + $0x3c0] sm:$0xff]
        %v1181 = vld [vmem:[#allocation8 + $0x3c8] sm:$0xff]
        %v1182 = vld [vmem:[#allocation8 + $0x3d0] sm:$0xff]
        %v1183 = vld [vmem:[#allocation8 + $0x3d8] sm:$0xff]
        %v1184 = vld [vmem:[#allocation8 + $0x3e0] sm:$0xff]
        %v1185 = vld [vmem:[#allocation8 + $0x3e8] sm:$0xff]
        %v1186 = vld [vmem:[#allocation8 + $0x3f0] sm:$0xff]
        %v1187 = vld [vmem:[#allocation8 + $0x3f8] sm:$0xff]
        %v1188 = vld [vmem:[#allocation8 + $0x400] sm:$0xff]
        %v1189 = vld [vmem:[#allocation8 + $0x408] sm:$0xff]
        %v1190 = vld [vmem:[#allocation8 + $0x410] sm:$0xff]
        %v1191 = vld [vmem:[#allocation8 + $0x418] sm:$0xff]
        %v1192 = vld [vmem:[#allocation8 + $0x420] sm:$0xff]
        %v1193 = vld [vmem:[#allocation8 + $0x428] sm:$0xff]
        %v1194 = vld [vmem:[#allocation8 + $0x430] sm:$0xff]
        %v1195 = vld [vmem:[#allocation8 + $0x438] sm:$0xff]
        %v1196 = vld [vmem:[#allocation8 + $0x440] sm:$0xff]
        %v1197 = vld [vmem:[#allocation8 + $0x448] sm:$0xff]
        %v1198 = vld [vmem:[#allocation8 + $0x450] sm:$0xff]
        %v1199 = vld [vmem:[#allocation8 + $0x458] sm:$0xff]
        %v1200 = vld [vmem:[#allocation8 + $0x460] sm:$0xff]
        %v1201 = vld [vmem:[#allocation8 + $0x468] sm:$0xff]
        %v1202 = vld [vmem:[#allocation8 + $0x470] sm:$0xff]
        %v1203 = vld [vmem:[#allocation8 + $0x478] sm:$0xff]
        %v1204 = vld [vmem:[#allocation8 + $0x480] sm:$0xff]
        %v1205 = vld [vmem:[#allocation8 + $0x488] sm:$0xff]
        %v1206 = vld [vmem:[#allocation8 + $0x490] sm:$0xff]
        %v1207 = vld [vmem:[#allocation8 + $0x498] sm:$0xff]
        %v1208 = vld [vmem:[#allocation8 + $0x4a0] sm:$0xff]
        %v1209 = vld [vmem:[#allocation8 + $0x4a8] sm:$0xff]
        %v1210 = vld [vmem:[#allocation8 + $0x4b0] sm:$0xff]
        %v1211 = vld [vmem:[#allocation8 + $0x4b8] sm:$0xff]
        %v1212 = vld [vmem:[#allocation8 + $0x4c0] sm:$0xff]
        %v1213 = vld [vmem:[#allocation8 + $0x4c8] sm:$0xff]
        %v1214 = vld [vmem:[#allocation8 + $0x4d0] sm:$0xff]
        %v1215 = vld [vmem:[#allocation8 + $0x4d8] sm:$0xff]
        %v1216 = vld [vmem:[#allocation8 + $0x4e0] sm:$0xff]
        %v1217 = vld [vmem:[#allocation8 + $0x4e8] sm:$0xff]
        %v1218 = vld [vmem:[#allocation8 + $0x4f0] sm:$0xff]
        %v1219 = vld [vmem:[#allocation8 + $0x4f8] sm:$0xff]
        %v1220 = vld [vmem:[#allocation8 + $0x500] sm:$0xff]
        %v1221 = vld [vmem:[#allocation8 + $0x508] sm:$0xff]
        %v1222 = vld [vmem:[#allocation8 + $0x510] sm:$0xff]
        %v1223 = vld [vmem:[#allocation8 + $0x518] sm:$0xff]
        %v1224 = vld [vmem:[#allocation8 + $0x520] sm:$0xff]
        %v1225 = vld [vmem:[#allocation8 + $0x528] sm:$0xff]
        %v1226 = vld [vmem:[#allocation8 + $0x530] sm:$0xff]
        %v1227 = vld [vmem:[#allocation8 + $0x538] sm:$0xff]
        %v1228 = vld [vmem:[#allocation8 + $0x540] sm:$0xff]
        %v1229 = vld [vmem:[#allocation8 + $0x548] sm:$0xff]
        %v1230 = vld [vmem:[#allocation8 + $0x550] sm:$0xff]
        %v1231 = vld [vmem:[#allocation8 + $0x558] sm:$0xff]
        %v1232 = vld [vmem:[#allocation8 + $0x560] sm:$0xff]
        %v1233 = vld [vmem:[#allocation8 + $0x568] sm:$0xff]
        %v1234 = vld [vmem:[#allocation8 + $0x570] sm:$0xff]
        %v1235 = vld [vmem:[#allocation8 + $0x578] sm:$0xff]
        %v1236 = vld [vmem:[#allocation8 + $0x580] sm:$0xff]
        %v1237 = vld [vmem:[#allocation8 + $0x588] sm:$0xff]
        %v1238 = vld [vmem:[#allocation8 + $0x590] sm:$0xff]
        %v1239 = vld [vmem:[#allocation8 + $0x598] sm:$0xff]
        %v1240 = vld [vmem:[#allocation8 + $0x5a0] sm:$0xff]
        %v1241 = vld [vmem:[#allocation8 + $0x5a8] sm:$0xff]
        %v1242 = vld [vmem:[#allocation8 + $0x5b0] sm:$0xff]
        %v1243 = vld [vmem:[#allocation8 + $0x5b8] sm:$0xff]
        %v1244 = vld [vmem:[#allocation8 + $0x5c0] sm:$0xff]
        %v1245 = vld [vmem:[#allocation8 + $0x5c8] sm:$0xff]
        %v1246 = vld [vmem:[#allocation8 + $0x5d0] sm:$0xff]
        %v1247 = vld [vmem:[#allocation8 + $0x5d8] sm:$0xff]
        %v1248 = vld [vmem:[#allocation8 + $0x5e0] sm:$0xff]
        %v1249 = vld [vmem:[#allocation8 + $0x5e8] sm:$0xff]
        %v1250 = vld [vmem:[#allocation8 + $0x5f0] sm:$0xff]
        %v1251 = vld [vmem:[#allocation8 + $0x5f8] sm:$0xff]
        %v1252 = vld [vmem:[#allocation8 + $0x600] sm:$0xff]
        %v1253 = vld [vmem:[#allocation8 + $0x608] sm:$0xff]
        %v1254 = vld [vmem:[#allocation8 + $0x610] sm:$0xff]
        %v1255 = vld [vmem:[#allocation8 + $0x618] sm:$0xff]
        %v1256 = vld [vmem:[#allocation8 + $0x620] sm:$0xff]
        %v1257 = vld [vmem:[#allocation8 + $0x628] sm:$0xff]
        %v1258 = vld [vmem:[#allocation8 + $0x630] sm:$0xff]
        %v1259 = vld [vmem:[#allocation8 + $0x638] sm:$0xff]
        %v1260 = vld [vmem:[#allocation8 + $0x640] sm:$0xff]
        %v1261 = vld [vmem:[#allocation8 + $0x648] sm:$0xff]
        %v1262 = vld [vmem:[#allocation8 + $0x650] sm:$0xff]
        %v1263 = vld [vmem:[#allocation8 + $0x658] sm:$0xff]
        %v1264 = vld [vmem:[#allocation8 + $0x660] sm:$0xff]
        %v1265 = vld [vmem:[#allocation8 + $0x668] sm:$0xff]
        %v1266 = vld [vmem:[#allocation8 + $0x670] sm:$0xff]
        %v1267 = vld [vmem:[#allocation8 + $0x678] sm:$0xff]
        %v1268 = vld [vmem:[#allocation8 + $0x680] sm:$0xff]
        %v1269 = vld [vmem:[#allocation8 + $0x688] sm:$0xff]
        %v1270 = vld [vmem:[#allocation8 + $0x690] sm:$0xff]
        %v1271 = vld [vmem:[#allocation8 + $0x698] sm:$0xff]
        %v1272 = vld [vmem:[#allocation8 + $0x6a0] sm:$0xff]
        %v1273 = vld [vmem:[#allocation8 + $0x6a8] sm:$0xff]
        %v1274 = vld [vmem:[#allocation8 + $0x6b0] sm:$0xff]
        %v1275 = vld [vmem:[#allocation8 + $0x6b8] sm:$0xff]
        %v1276 = vld [vmem:[#allocation8 + $0x6c0] sm:$0xff]
        %v1277 = vld [vmem:[#allocation8 + $0x6c8] sm:$0xff]
        %v1278 = vld [vmem:[#allocation8 + $0x6d0] sm:$0xff]
        %v1279 = vld [vmem:[#allocation8 + $0x6d8] sm:$0xff]
        %v1280 = vld [vmem:[#allocation8 + $0x6e0] sm:$0xff]
        %v1281 = vld [vmem:[#allocation8 + $0x6e8] sm:$0xff]
        %v1282 = vld [vmem:[#allocation8 + $0x6f0] sm:$0xff]
        %v1283 = vld [vmem:[#allocation8 + $0x6f8] sm:$0xff]
        %v1284 = vld [vmem:[#allocation8 + $0x700] sm:$0xff]
        %v1285 = vld [vmem:[#allocation8 + $0x708] sm:$0xff]
        %v1286 = vld [vmem:[#allocation8 + $0x710] sm:$0xff]
        %v1287 = vld [vmem:[#allocation8 + $0x718] sm:$0xff]
        %v1288 = vld [vmem:[#allocation8 + $0x720] sm:$0xff]
        %v1289 = vld [vmem:[#allocation8 + $0x728] sm:$0xff]
        %v1290 = vld [vmem:[#allocation8 + $0x730] sm:$0xff]
        %v1291 = vld [vmem:[#allocation8 + $0x738] sm:$0xff]
        %v1292 = vld [vmem:[#allocation8 + $0x740] sm:$0xff]
        %v1293 = vld [vmem:[#allocation8 + $0x748] sm:$0xff]
        %v1294 = vld [vmem:[#allocation8 + $0x750] sm:$0xff]
        %v1295 = vld [vmem:[#allocation8 + $0x758] sm:$0xff]
        %v1296 = vld [vmem:[#allocation8 + $0x760] sm:$0xff]
        %v1297 = vld [vmem:[#allocation8 + $0x768] sm:$0xff]
        %v1298 = vld [vmem:[#allocation8 + $0x770] sm:$0xff]
        %v1299 = vld [vmem:[#allocation8 + $0x778] sm:$0xff]
        %v1300 = vld [vmem:[#allocation8 + $0x780] sm:$0xff]
        %v1301 = vld [vmem:[#allocation8 + $0x788] sm:$0xff]
        %v1302 = vld [vmem:[#allocation8 + $0x790] sm:$0xff]
        %v1303 = vld [vmem:[#allocation8 + $0x798] sm:$0xff]
        %v1304 = vld [vmem:[#allocation8 + $0x7a0] sm:$0xff]
        %v1305 = vld [vmem:[#allocation8 + $0x7a8] sm:$0xff]
        %v1306 = vld [vmem:[#allocation8 + $0x7b0] sm:$0xff]
        %v1307 = vld [vmem:[#allocation8 + $0x7b8] sm:$0xff]
        %v1308 = vld [vmem:[#allocation8 + $0x7c0] sm:$0xff]
        %v1309 = vld [vmem:[#allocation8 + $0x7c8] sm:$0xff]
        %v1310 = vld [vmem:[#allocation8 + $0x7d0] sm:$0xff]
        %v1311 = vld [vmem:[#allocation8 + $0x7d8] sm:$0xff]
        %v1312 = vld [vmem:[#allocation8 + $0x7e0] sm:$0xff]
        %v1313 = vld [vmem:[#allocation8 + $0x7e8] sm:$0xff]
        %v1314 = vld [vmem:[#allocation8 + $0x7f0] sm:$0xff]
        %v1315 = vld [vmem:[#allocation8 + $0x7f8] sm:$0xff]
        %v1316 = vld [vmem:[#allocation10] sm:$0x1]
        %v1319 = vperm.slane %v1058, 0
        %v1320 = vperm.slane %v1058, 1
        %v1321 = vperm.slane %v1058, 2
        %v1322 = vperm.slane %v1058, 3
        %v1323 = vperm.slane %v1058, 4
        %v1324 = vperm.slane %v1058, 5
        %v1325 = vperm.slane %v1058, 6
        %v1326 = vperm.slane %v1058, 7
        %v1327 = vperm.slane %v1059, 0
        %v1328 = vperm.slane %v1059, 1
        %v1329 = vperm.slane %v1059, 2
        %v1330 = vperm.slane %v1059, 3
        %v1331 = vperm.slane %v1059, 4
        %v1332 = vperm.slane %v1059, 5
        %v1333 = vperm.slane %v1059, 6
        %v1334 = vperm.slane %v1059, 7
        %1351 = vmatpush.msra.mxu0 %v1075
        %1352 = vmatpush.msra.mxu0 %v1074
        %1353 = vmatpush.msra.mxu0 %v1073
        %1354 = vmatpush.msra.mxu0 %v1072
        %1355 = vmatpush.msra.mxu0 %v1071
        %1356 = vmatpush.msra.mxu0 %v1070
        %1357 = vmatpush.msra.mxu0 %v1069
        %1358 = vmatpush.msra.mxu0 %v1068
        %1359 = vmatpush.msra.mxu0 %v1067
        %1360 = vmatpush.msra.mxu0 %v1066
        %1361 = vmatpush.msra.mxu0 %v1065
        %1362 = vmatpush.msra.mxu0 %v1064
        %1363 = vmatpush.msra.mxu0 %v1063
        %1364 = vmatpush.msra.mxu0 %v1062
        %1365 = vmatpush.msra.mxu0 %v1061
        %1366 = vmatpush.msra.mxu0 %v1060
        %1367 = vmatmul.f32.gmra.mxu0 %v1319
        %v1368 = vpop.f32.mrf.mxu0
        %v1369 = vadd.f32 %v1316, %v1368
        %1370 = vdwg.mxu0
        %1371 = vmatpush.msra.mxu0 %v1091
        %1372 = vmatpush.msra.mxu0 %v1090
        %1373 = vmatpush.msra.mxu0 %v1089
        %1374 = vmatpush.msra.mxu0 %v1088
        %1375 = vmatpush.msra.mxu0 %v1087
        %1376 = vmatpush.msra.mxu0 %v1086
        %1377 = vmatpush.msra.mxu0 %v1085
        %1378 = vmatpush.msra.mxu0 %v1084
        %1379 = vmatpush.msra.mxu0 %v1083
        %1380 = vmatpush.msra.mxu0 %v1082
        %1381 = vmatpush.msra.mxu0 %v1081
        %1382 = vmatpush.msra.mxu0 %v1080
        %1383 = vmatpush.msra.mxu0 %v1079
        %1384 = vmatpush.msra.mxu0 %v1078
        %1385 = vmatpush.msra.mxu0 %v1077
        %1386 = vmatpush.msra.mxu0 %v1076
        %1387 = vmatmul.f32.gmra.mxu0 %v1320
        %v1388 = vpop.f32.mrf.mxu0
        %v1389 = vadd.f32 %v1369, %v1388
        %1390 = vdwg.mxu0
        %1391 = vmatpush.msra.mxu0 %v1107
        %1392 = vmatpush.msra.mxu0 %v1106
        %1393 = vmatpush.msra.mxu0 %v1105
        %1394 = vmatpush.msra.mxu0 %v1104
        %1395 = vmatpush.msra.mxu0 %v1103
        %1396 = vmatpush.msra.mxu0 %v1102
        %1397 = vmatpush.msra.mxu0 %v1101
        %1398 = vmatpush.msra.mxu0 %v1100
        %1399 = vmatpush.msra.mxu0 %v1099
        %1400 = vmatpush.msra.mxu0 %v1098
        %1401 = vmatpush.msra.mxu0 %v1097
        %1402 = vmatpush.msra.mxu0 %v1096
        %1403 = vmatpush.msra.mxu0 %v1095
        %1404 = vmatpush.msra.mxu0 %v1094
        %1405 = vmatpush.msra.mxu0 %v1093
        %1406 = vmatpush.msra.mxu0 %v1092
        %1407 = vmatmul.f32.gmra.mxu0 %v1321
        %v1408 = vpop.f32.mrf.mxu0
        %v1409 = vadd.f32 %v1389, %v1408
        %1410 = vdwg.mxu0
        %1411 = vmatpush.msra.mxu0 %v1123
        %1412 = vmatpush.msra.mxu0 %v1122
        %1413 = vmatpush.msra.mxu0 %v1121
        %1414 = vmatpush.msra.mxu0 %v1120
        %1415 = vmatpush.msra.mxu0 %v1119
        %1416 = vmatpush.msra.mxu0 %v1118
        %1417 = vmatpush.msra.mxu0 %v1117
        %1418 = vmatpush.msra.mxu0 %v1116
        %1419 = vmatpush.msra.mxu0 %v1115
        %1420 = vmatpush.msra.mxu0 %v1114
        %1421 = vmatpush.msra.mxu0 %v1113
        %1422 = vmatpush.msra.mxu0 %v1112
        %1423 = vmatpush.msra.mxu0 %v1111
        %1424 = vmatpush.msra.mxu0 %v1110
        %1425 = vmatpush.msra.mxu0 %v1109
        %1426 = vmatpush.msra.mxu0 %v1108
        %1427 = vmatmul.f32.gmra.mxu0 %v1322
        %v1428 = vpop.f32.mrf.mxu0
        %v1429 = vadd.f32 %v1409, %v1428
        %1430 = vdwg.mxu0
        %1431 = vmatpush.msra.mxu0 %v1139
        %1432 = vmatpush.msra.mxu0 %v1138
        %1433 = vmatpush.msra.mxu0 %v1137
        %1434 = vmatpush.msra.mxu0 %v1136
        %1435 = vmatpush.msra.mxu0 %v1135
        %1436 = vmatpush.msra.mxu0 %v1134
        %1437 = vmatpush.msra.mxu0 %v1133
        %1438 = vmatpush.msra.mxu0 %v1132
        %1439 = vmatpush.msra.mxu0 %v1131
        %1440 = vmatpush.msra.mxu0 %v1130
        %1441 = vmatpush.msra.mxu0 %v1129
        %1442 = vmatpush.msra.mxu0 %v1128
        %1443 = vmatpush.msra.mxu0 %v1127
        %1444 = vmatpush.msra.mxu0 %v1126
        %1445 = vmatpush.msra.mxu0 %v1125
        %1446 = vmatpush.msra.mxu0 %v1124
        %1447 = vmatmul.f32.gmra.mxu0 %v1323
        %v1448 = vpop.f32.mrf.mxu0
        %v1449 = vadd.f32 %v1429, %v1448
        %1450 = vdwg.mxu0
        %1451 = vmatpush.msra.mxu0 %v1155
        %1452 = vmatpush.msra.mxu0 %v1154
        %1453 = vmatpush.msra.mxu0 %v1153
        %1454 = vmatpush.msra.mxu0 %v1152
        %1455 = vmatpush.msra.mxu0 %v1151
        %1456 = vmatpush.msra.mxu0 %v1150
        %1457 = vmatpush.msra.mxu0 %v1149
        %1458 = vmatpush.msra.mxu0 %v1148
        %1459 = vmatpush.msra.mxu0 %v1147
        %1460 = vmatpush.msra.mxu0 %v1146
        %1461 = vmatpush.msra.mxu0 %v1145
        %1462 = vmatpush.msra.mxu0 %v1144
        %1463 = vmatpush.msra.mxu0 %v1143
        %1464 = vmatpush.msra.mxu0 %v1142
        %1465 = vmatpush.msra.mxu0 %v1141
        %1466 = vmatpush.msra.mxu0 %v1140
        %1467 = vmatmul.f32.gmra.mxu0 %v1324
        %v1468 = vpop.f32.mrf.mxu0
        %v1469 = vadd.f32 %v1449, %v1468
        %1470 = vdwg.mxu0
        %1471 = vmatpush.msra.mxu0 %v1171
        %1472 = vmatpush.msra.mxu0 %v1170
        %1473 = vmatpush.msra.mxu0 %v1169
        %1474 = vmatpush.msra.mxu0 %v1168
        %1475 = vmatpush.msra.mxu0 %v1167
        %1476 = vmatpush.msra.mxu0 %v1166
        %1477 = vmatpush.msra.mxu0 %v1165
        %1478 = vmatpush.msra.mxu0 %v1164
        %1479 = vmatpush.msra.mxu0 %v1163
        %1480 = vmatpush.msra.mxu0 %v1162
        %1481 = vmatpush.msra.mxu0 %v1161
        %1482 = vmatpush.msra.mxu0 %v1160
        %1483 = vmatpush.msra.mxu0 %v1159
        %1484 = vmatpush.msra.mxu0 %v1158
        %1485 = vmatpush.msra.mxu0 %v1157
        %1486 = vmatpush.msra.mxu0 %v1156
        %1487 = vmatmul.f32.gmra.mxu0 %v1325
        %v1488 = vpop.f32.mrf.mxu0
        %v1489 = vadd.f32 %v1469, %v1488
        %1490 = vdwg.mxu0
        %1491 = vmatpush.msra.mxu0 %v1187
        %1492 = vmatpush.msra.mxu0 %v1186
        %1493 = vmatpush.msra.mxu0 %v1185
        %1494 = vmatpush.msra.mxu0 %v1184
        %1495 = vmatpush.msra.mxu0 %v1183
        %1496 = vmatpush.msra.mxu0 %v1182
        %1497 = vmatpush.msra.mxu0 %v1181
        %1498 = vmatpush.msra.mxu0 %v1180
        %1499 = vmatpush.msra.mxu0 %v1179
        %1500 = vmatpush.msra.mxu0 %v1178
        %1501 = vmatpush.msra.mxu0 %v1177
        %1502 = vmatpush.msra.mxu0 %v1176
        %1503 = vmatpush.msra.mxu0 %v1175
        %1504 = vmatpush.msra.mxu0 %v1174
        %1505 = vmatpush.msra.mxu0 %v1173
        %1506 = vmatpush.msra.mxu0 %v1172
        %1507 = vmatmul.f32.gmra.mxu0 %v1326
        %v1508 = vpop.f32.mrf.mxu0
        %v1509 = vadd.f32 %v1489, %v1508
        %1510 = vdwg.mxu0
        %1511 = vmatpush.msra.mxu0 %v1203
        %1512 = vmatpush.msra.mxu0 %v1202
        %1513 = vmatpush.msra.mxu0 %v1201
        %1514 = vmatpush.msra.mxu0 %v1200
        %1515 = vmatpush.msra.mxu0 %v1199
        %1516 = vmatpush.msra.mxu0 %v1198
        %1517 = vmatpush.msra.mxu0 %v1197
        %1518 = vmatpush.msra.mxu0 %v1196
        %1519 = vmatpush.msra.mxu0 %v1195
        %1520 = vmatpush.msra.mxu0 %v1194
        %1521 = vmatpush.msra.mxu0 %v1193
        %1522 = vmatpush.msra.mxu0 %v1192
        %1523 = vmatpush.msra.mxu0 %v1191
        %1524 = vmatpush.msra.mxu0 %v1190
        %1525 = vmatpush.msra.mxu0 %v1189
        %1526 = vmatpush.msra.mxu0 %v1188
        %1527 = vmatmul.f32.gmra.mxu0 %v1327
        %v1528 = vpop.f32.mrf.mxu0
        %v1529 = vadd.f32 %v1509, %v1528
        %1530 = vdwg.mxu0
        %1531 = vmatpush.msra.mxu0 %v1219
        %1532 = vmatpush.msra.mxu0 %v1218
        %1533 = vmatpush.msra.mxu0 %v1217
        %1534 = vmatpush.msra.mxu0 %v1216
        %1535 = vmatpush.msra.mxu0 %v1215
        %1536 = vmatpush.msra.mxu0 %v1214
        %1537 = vmatpush.msra.mxu0 %v1213
        %1538 = vmatpush.msra.mxu0 %v1212
        %1539 = vmatpush.msra.mxu0 %v1211
        %1540 = vmatpush.msra.mxu0 %v1210
        %1541 = vmatpush.msra.mxu0 %v1209
        %1542 = vmatpush.msra.mxu0 %v1208
        %1543 = vmatpush.msra.mxu0 %v1207
        %1544 = vmatpush.msra.mxu0 %v1206
        %1545 = vmatpush.msra.mxu0 %v1205
        %1546 = vmatpush.msra.mxu0 %v1204
        %1547 = vmatmul.f32.gmra.mxu0 %v1328
        %v1548 = vpop.f32.mrf.mxu0
        %v1549 = vadd.f32 %v1529, %v1548
        %1550 = vdwg.mxu0
        %1551 = vmatpush.msra.mxu0 %v1235
        %1552 = vmatpush.msra.mxu0 %v1234
        %1553 = vmatpush.msra.mxu0 %v1233
        %1554 = vmatpush.msra.mxu0 %v1232
        %1555 = vmatpush.msra.mxu0 %v1231
        %1556 = vmatpush.msra.mxu0 %v1230
        %1557 = vmatpush.msra.mxu0 %v1229
        %1558 = vmatpush.msra.mxu0 %v1228
        %1559 = vmatpush.msra.mxu0 %v1227
        %1560 = vmatpush.msra.mxu0 %v1226
        %1561 = vmatpush.msra.mxu0 %v1225
        %1562 = vmatpush.msra.mxu0 %v1224
        %1563 = vmatpush.msra.mxu0 %v1223
        %1564 = vmatpush.msra.mxu0 %v1222
        %1565 = vmatpush.msra.mxu0 %v1221
        %1566 = vmatpush.msra.mxu0 %v1220
        %1567 = vmatmul.f32.gmra.mxu0 %v1329
        %v1568 = vpop.f32.mrf.mxu0
        %v1569 = vadd.f32 %v1549, %v1568
        %1570 = vdwg.mxu0
        %1571 = vmatpush.msra.mxu0 %v1251
        %1572 = vmatpush.msra.mxu0 %v1250
        %1573 = vmatpush.msra.mxu0 %v1249
        %1574 = vmatpush.msra.mxu0 %v1248
        %1575 = vmatpush.msra.mxu0 %v1247
        %1576 = vmatpush.msra.mxu0 %v1246
        %1577 = vmatpush.msra.mxu0 %v1245
        %1578 = vmatpush.msra.mxu0 %v1244
        %1579 = vmatpush.msra.mxu0 %v1243
        %1580 = vmatpush.msra.mxu0 %v1242
        %1581 = vmatpush.msra.mxu0 %v1241
        %1582 = vmatpush.msra.mxu0 %v1240
        %1583 = vmatpush.msra.mxu0 %v1239
        %1584 = vmatpush.msra.mxu0 %v1238
        %1585 = vmatpush.msra.mxu0 %v1237
        %1586 = vmatpush.msra.mxu0 %v1236
        %1587 = vmatmul.f32.gmra.mxu0 %v1330
        %v1588 = vpop.f32.mrf.mxu0
        %v1589 = vadd.f32 %v1569, %v1588
        %1590 = vdwg.mxu0
        %1591 = vmatpush.msra.mxu0 %v1267
        %1592 = vmatpush.msra.mxu0 %v1266
        %1593 = vmatpush.msra.mxu0 %v1265
        %1594 = vmatpush.msra.mxu0 %v1264
        %1595 = vmatpush.msra.mxu0 %v1263
        %1596 = vmatpush.msra.mxu0 %v1262
        %1597 = vmatpush.msra.mxu0 %v1261
        %1598 = vmatpush.msra.mxu0 %v1260
        %1599 = vmatpush.msra.mxu0 %v1259
        %1600 = vmatpush.msra.mxu0 %v1258
        %1601 = vmatpush.msra.mxu0 %v1257
        %1602 = vmatpush.msra.mxu0 %v1256
        %1603 = vmatpush.msra.mxu0 %v1255
        %1604 = vmatpush.msra.mxu0 %v1254
        %1605 = vmatpush.msra.mxu0 %v1253
        %1606 = vmatpush.msra.mxu0 %v1252
        %1607 = vmatmul.f32.gmra.mxu0 %v1331
        %v1608 = vpop.f32.mrf.mxu0
        %v1609 = vadd.f32 %v1589, %v1608
        %1610 = vdwg.mxu0
        %1611 = vmatpush.msra.mxu0 %v1283
        %1612 = vmatpush.msra.mxu0 %v1282
        %1613 = vmatpush.msra.mxu0 %v1281
        %1614 = vmatpush.msra.mxu0 %v1280
        %1615 = vmatpush.msra.mxu0 %v1279
        %1616 = vmatpush.msra.mxu0 %v1278
        %1617 = vmatpush.msra.mxu0 %v1277
        %1618 = vmatpush.msra.mxu0 %v1276
        %1619 = vmatpush.msra.mxu0 %v1275
        %1620 = vmatpush.msra.mxu0 %v1274
        %1621 = vmatpush.msra.mxu0 %v1273
        %1622 = vmatpush.msra.mxu0 %v1272
        %1623 = vmatpush.msra.mxu0 %v1271
        %1624 = vmatpush.msra.mxu0 %v1270
        %1625 = vmatpush.msra.mxu0 %v1269
        %1626 = vmatpush.msra.mxu0 %v1268
        %1627 = vmatmul.f32.gmra.mxu0 %v1332
        %v1628 = vpop.f32.mrf.mxu0
        %v1629 = vadd.f32 %v1609, %v1628
        %1630 = vdwg.mxu0
        %1631 = vmatpush.msra.mxu0 %v1299
        %1632 = vmatpush.msra.mxu0 %v1298
        %1633 = vmatpush.msra.mxu0 %v1297
        %1634 = vmatpush.msra.mxu0 %v1296
        %1635 = vmatpush.msra.mxu0 %v1295
        %1636 = vmatpush.msra.mxu0 %v1294
        %1637 = vmatpush.msra.mxu0 %v1293
        %1638 = vmatpush.msra.mxu0 %v1292
        %1639 = vmatpush.msra.mxu0 %v1291
        %1640 = vmatpush.msra.mxu0 %v1290
        %1641 = vmatpush.msra.mxu0 %v1289
        %1642 = vmatpush.msra.mxu0 %v1288
        %1643 = vmatpush.msra.mxu0 %v1287
        %1644 = vmatpush.msra.mxu0 %v1286
        %1645 = vmatpush.msra.mxu0 %v1285
        %1646 = vmatpush.msra.mxu0 %v1284
        %1647 = vmatmul.f32.gmra.mxu0 %v1333
        %v1648 = vpop.f32.mrf.mxu0
        %v1649 = vadd.f32 %v1629, %v1648
        %1650 = vdwg.mxu0
        %1651 = vmatpush.msra.mxu0 %v1315
        %1652 = vmatpush.msra.mxu0 %v1314
        %1653 = vmatpush.msra.mxu0 %v1313
        %1654 = vmatpush.msra.mxu0 %v1312
        %1655 = vmatpush.msra.mxu0 %v1311
        %1656 = vmatpush.msra.mxu0 %v1310
        %1657 = vmatpush.msra.mxu0 %v1309
        %1658 = vmatpush.msra.mxu0 %v1308
        %1659 = vmatpush.msra.mxu0 %v1307
        %1660 = vmatpush.msra.mxu0 %v1306
        %1661 = vmatpush.msra.mxu0 %v1305
        %1662 = vmatpush.msra.mxu0 %v1304
        %1663 = vmatpush.msra.mxu0 %v1303
        %1664 = vmatpush.msra.mxu0 %v1302
        %1665 = vmatpush.msra.mxu0 %v1301
        %1666 = vmatpush.msra.mxu0 %v1300
        %1667 = vmatmul.f32.gmra.mxu0 %v1334
        %v1668 = vpop.f32.mrf.mxu0
        %v1669 = vadd.f32 %v1649, %v1668
        %1670 = vdwg.mxu0
        %v1671 = vmax.f32 %v1669, 0.0
        %v1672 = vld [vmem:[%s5] sm:$0xff]
        %v1673 = vld [vmem:[%s5 + $0x8] sm:$0xff]
        %v1674 = vld [vmem:[%s5 + $0x10] sm:$0xff]
        %v1675 = vld [vmem:[%s5 + $0x18] sm:$0xff]
        %v1676 = vld [vmem:[%s5 + $0x20] sm:$0xff]
        %v1677 = vld [vmem:[%s5 + $0x28] sm:$0xff]
        %v1678 = vld [vmem:[%s5 + $0x30] sm:$0xff]
        %v1679 = vld [vmem:[%s5 + $0x38] sm:$0xff]
        %v1680 = vld [vmem:[%s5 + $0x40] sm:$0xff]
        %v1681 = vld [vmem:[%s5 + $0x48] sm:$0xff]
        %v1682 = vld [vmem:[%s5 + $0x50] sm:$0xff]
        %v1683 = vld [vmem:[%s5 + $0x58] sm:$0xff]
        %v1684 = vld [vmem:[%s5 + $0x60] sm:$0xff]
        %v1685 = vld [vmem:[%s5 + $0x68] sm:$0xff]
        %v1686 = vld [vmem:[%s5 + $0x70] sm:$0xff]
        %v1687 = vld [vmem:[%s5 + $0x78] sm:$0xff]
        %v1688 = vld [vmem:[#allocation11] sm:$0x1]
        %1689 = vmatpush.msra.mxu0 %v1687
        %1690 = vmatpush.msra.mxu0 %v1686
        %1691 = vmatpush.msra.mxu0 %v1685
        %1692 = vmatpush.msra.mxu0 %v1684
        %1693 = vmatpush.msra.mxu0 %v1683
        %1694 = vmatpush.msra.mxu0 %v1682
        %1695 = vmatpush.msra.mxu0 %v1681
        %1696 = vmatpush.msra.mxu0 %v1680
        %1697 = vmatpush.msra.mxu0 %v1679
        %1698 = vmatpush.msra.mxu0 %v1678
        %1699 = vmatpush.msra.mxu0 %v1677
        %1700 = vmatpush.msra.mxu0 %v1676
        %1701 = vmatpush.msra.mxu0 %v1675
        %1702 = vmatpush.msra.mxu0 %v1674
        %1703 = vmatpush.msra.mxu0 %v1673
        %1704 = vmatpush.msra.mxu0 %v1672
        %1705 = vmatmul.f32.gmra.mxu0 %v1671
        %v1706 = vpop.f32.mrf.mxu0
        %v1707 = vadd.f32 %v1688, %v1706
        %1708 = vdwg.mxu0
        %v1709 = vmax.f32 %v1707, 0.0
        %v1710 = vld [vmem:[%s7] sm:$0xff]
        %v1711 = vld [vmem:[%s7 + $0x8] sm:$0xff]
        %v1712 = vld [vmem:[%s7 + $0x10] sm:$0xff]
        %v1713 = vld [vmem:[%s7 + $0x18] sm:$0xff]
        %v1714 = vld [vmem:[#allocation13] sm:$0x1]
        %vm1715 = vcmask 261120
        %v1717 = vsel %vm1715, %v1709, 0
        %1719 = vmatpush.msra.mxu0 0.0
        %1720 = vmatpush.msra.mxu0 0.0
        %1721 = vmatpush.msra.mxu0 0.0
        %1722 = vmatpush.msra.mxu0 0.0
        %1723 = vmatpush.msra.mxu0 0.0
        %1724 = vmatpush.msra.mxu0 0.0
        %1725 = vmatpush.msra.mxu0 0.0
        %1726 = vmatpush.msra.mxu0 0.0
        %1727 = vmatpush.msra.mxu0 0.0
        %1728 = vmatpush.msra.mxu0 0.0
        %1729 = vmatpush.msra.mxu0 0.0
        %1730 = vmatpush.msra.mxu0 0.0
        %1731 = vmatpush.msra.mxu0 %v1713
        %1732 = vmatpush.msra.mxu0 %v1712
        %1733 = vmatpush.msra.mxu0 %v1711
        %1734 = vmatpush.msra.mxu0 %v1710
        %1735 = vmatmul.f32.gmra.mxu0 %v1717
        %v1736 = vpop.f32.mrf.mxu0
        %v1737 = vadd.f32 %v1714, %v1736
        %1738 = vdwg.mxu0
        %vm1739 = vcmask 8192
        %1740 = vst.msk [vmem:[%s440] sm:$0x1] %vm1739, %v1737
        %s1741 = sand.u32 %s231, 1
        %s1742 = scalar_lea.sflag [#allocation4], %s1741
        %s1743 = sand.u32 %s231, 1
        %s1744 = scalar_lea.vmem [#allocation14], %s1743
        // Predicated region
        $region85: #{tpu_custom_call.1} parent=55 // pred_check
          %p1745 = pneg %p241
        $region86: #{tpu_custom_call.1} parent=55 // pred_check_branch
          %1747 = sbr.rel (%p1745) target = $region88
        $region87: #{tpu_custom_call.1} parent=55 // pred_region
          %1749 = vsyncadd %s1742, 0
          %s1750 = scalar_lea.hbm %s9, %s29
          %s1752 = sshll.u32 %s1744, 4
          %s1753 = int_to_ptr.vmem [resolvable:$true] %s1752
          %s1754 = sshll.u32 %s1750, 4
          %s1755 = int_to_ptr.hbm [resolvable:$true] %s1754
          %1757 = dma.vmem_to_hbm [thread:$0]  %s1753, 16, %s1755, %s1742
        $region88: #{tpu_custom_call.1} parent=55 // pred_fallthru
          _
      $region56: #{tpu_custom_call.1} parent=5 // pred_fallthru
        _
      %p1758 = scmp.le.s32.totalorder 2, %s24
      // Predicated region
      $region89: #{tpu_custom_call.1} parent=5 // pred_check
        %p1759 = pneg %p1758
      $region90: #{tpu_custom_call.1} parent=5 // pred_check_branch
        %1761 = sbr.rel (%p1759) target = $region92
      $region91: #{tpu_custom_call.1} parent=5 // pred_region
        %s1762 = ssub.s32 %s24, 2
        // Predicated region
        $region93: #{tpu_custom_call.1} parent=91 // pred_check
          %p1763 = pneg %p247
        $region94: #{tpu_custom_call.1} parent=91 // pred_check_branch
          %1765 = sbr.rel (%p1763) target = $region96
        $region95: #{tpu_custom_call.1} parent=91 // pred_region
          %s1766 = sand.u32 %s232, 1
          %s1767 = scalar_lea.sflag [#allocation4], %s1766
          %s1768 = sand.u32 %s232, 1
          %s1769 = scalar_lea.vmem [#allocation14], %s1768
          %1771 = dma.done %s1767, 16
        $region96: #{tpu_custom_call.1} parent=91 // pred_fallthru
          _
      $region92: #{tpu_custom_call.1} parent=5 // pred_fallthru
        _
    $region6: #{tpu_custom_call.1} parent=1 // loop_footer
      %s28 = sadd.s32 1, %s24
    $region7: #{tpu_custom_call.1} parent=1 // loop_footer_branch
      %23 = sbr.rel target = $region3
    $region8: #{tpu_custom_call.1} parent=1 // loop_exit
      _
    %1772 = vsyncpa [#allocation3], 1
    %s1773 = scalar_lea.sflag [#allocation3], 1
    %1774 = vsyncpa %s1773, 1
    %1775 = vsyncpa [#allocation6], 1
    %1776 = vsyncpa [#allocation9], 1
    %1777 = vsyncpa [#allocation12], 1
    %1778 = vsyncpa [#allocation4], 1
    %s1779 = scalar_lea.sflag [#allocation4], 1
    %1780 = vsyncpa %s1779, 1

</llo_original>
